<compile_context>
chip_gen: v6e
topology: v6e:2x2x1
jax: 0.10.0
libtpu: 0.0.40
codegen_flags: <defaults>
</compile_context>

<pallas_src>
import numpy as np
import jax
import jax.numpy as jnp
from jax import lax
from jax.experimental import pallas as pl
from jax.experimental.pallas import tpu as pltpu


def _round_up(x, m):
    return ((x + m - 1) // m) * m


# ----------------------------------------------------------------------------
# Fused Pallas kernel: 4x GRU (block-diagonal) recurrence + MLP Q head
# ----------------------------------------------------------------------------

def fused_critic_kernel(x_ref, mask_ref, wih_ref, whh_ref, bih_ref, bhh_ref,
                        sel_ref, w1_ref, b1_ref, w2_ref, b2_ref, wq_ref, bq_ref,
                        q_ref, gx_ref):
    """Shapes (H = per-encoder hidden, H4 = 4H, G = 12H, Bp = padded batch):
       x_ref   : (T*Bp, E)   bf16  time-major flattened embedded tokens
       mask_ref: (T*Bp, 1)   f32   1.0 while t < len(seq), else 0.0
       wih_ref : (E, G)      bf16  input->gates for all 4 encoders, gate-major
       whh_ref : (H4, G)     bf16  block-diagonal hidden->gates
       bih/bhh : (1, G)      f32
       sel_ref : (Np, 4*Bp)  f32   static one-hot [obs|look|inv|act] row selector
       w1/w2   : (H4,H)/(H,H) bf16 ; b1/b2 : (1,H) f32
       wq_ref  : (1, H)      f32   Q1 weight as a row (VPU reduce, no 1-lane MXU)
       bq_ref  : (1, 1)      f32
       q_ref   : (Np, 128)   f32   q broadcast across lanes (lane-dense store)
       gx_ref  : (T*Bp, G)   f32   scratch: hoisted input projections
    """
    Np, Bp4 = sel_ref.shape
    Bp = Bp4 // 4
    T = x_ref.shape[0] // Bp
    H4 = whh_ref.shape[0]          # 4H: stacked hidden width (one block/encoder)
    H = H4 // 4

    # ---- hoisted input projection: ONE matmul covers all timesteps/encoders ----
    gx_ref[...] = (
        jnp.dot(x_ref[...], wih_ref[...], preferred_element_type=jnp.float32)
        + bih_ref[...])

    bhh = bhh_ref[...]

    def step(t, h):
        off = pl.multiple_of(t * Bp, Bp)                    # Bp is a multiple of 8
        gx = gx_ref[pl.ds(off, Bp), :]                      # (Bp, 12H) f32
        gh = jnp.dot(h.astype(jnp.bfloat16), whh_ref[...],
                     preferred_element_type=jnp.float32) + bhh
        # PyTorch GRU gate order [r, z, n]; gate-major blocks of width 4H.
        r = jax.nn.sigmoid(gx[:, 0 * H4:1 * H4] + gh[:, 0 * H4:1 * H4])
        z = jax.nn.sigmoid(gx[:, 1 * H4:2 * H4] + gh[:, 1 * H4:2 * H4])
        n = jnp.tanh(gx[:, 2 * H4:3 * H4] + r * gh[:, 2 * H4:3 * H4])
        h_new = (1.0 - z) * n + z * h
        m = mask_ref[pl.ds(off, Bp), :]                     # (Bp, 1) f32
        return h + m * (h_new - h)                          # freeze past seq end

    h0 = jnp.zeros((Bp, H4), dtype=jnp.float32)
    h_fin = lax.fori_loop(0, T, step, h0, unroll=(T <= 32))

    # ---- gather + concat [obs|look|inv|act] hiddens via one selection matmul ----
    col = lax.broadcasted_iota(jnp.int32, (1, H4), 1)
    blocks = []
    for e in range(4):                                       # keep only encoder e's
        cmask = ((col >= e * H) & (col < (e + 1) * H)).astype(jnp.float32)
        blocks.append(h_fin * cmask)                         # hidden columns
    m_cat = jnp.concatenate(blocks, axis=0)                  # (4*Bp, 4H)
    zcat = jnp.dot(sel_ref[...], m_cat,
                   preferred_element_type=jnp.float32)       # (Np, 4H)

    # ---- fused MLP head ----
    z1 = jnp.maximum(
        jnp.dot(zcat.astype(jnp.bfloat16), w1_ref[...],
                preferred_element_type=jnp.float32) + b1_ref[...], 0.0)
    z2 = jnp.maximum(
        jnp.dot(z1.astype(jnp.bfloat16), w2_ref[...],
                preferred_element_type=jnp.float32) + b2_ref[...], 0.0)
    # Q1: VPU multiply + lane reduction instead of an (N,32)@(32,1) MXU push.
    q = jnp.sum(z2 * wq_ref[...], axis=-1, keepdims=True) + bq_ref[...]  # (Np,1)
    q_ref[...] = jnp.broadcast_to(q, q_ref.shape)            # lane-dense store


_VMEM = pl.BlockSpec(memory_space=pltpu.MemorySpace.VMEM)


def run_fused_critic(x2d, mask2d, sel, kp):
    Np = sel.shape[0]
    TB = x2d.shape[0]
    G = kp["wih_blk"].shape[1]
    return pl.pallas_call(
        fused_critic_kernel,
        out_shape=jax.ShapeDtypeStruct((Np, 128), jnp.float32),
        in_specs=[_VMEM] * 13,
        out_specs=_VMEM,
        scratch_shapes=[pltpu.VMEM((TB, G), jnp.float32)],
    )(x2d, mask2d, kp["wih_blk"], kp["whh_blk"], kp["bih_blk"], kp["bhh_blk"],
      sel, kp["w1"], kp["b1"], kp["w2"], kp["b2"], kp["wq_row"], kp["bq"])


# ----------------------------------------------------------------------------
# Parameters (mirrors the PyTorch module's shapes + weight_init)
# ----------------------------------------------------------------------------

def init_params(key, vocab_size, embedding_dim, hidden_dim):
    E, H = embedding_dim, hidden_dim
    ks = jax.random.split(key, 10)

    def kaiming_uniform(k, shape, fan_in):                 # kaiming_uniform_ bound
        bound = float(np.sqrt(6.0 / fan_in))
        return jax.random.uniform(k, shape, jnp.float32, -bound, bound)

    def gru_params(k):                                     # PyTorch GRU default init
        k1, k2 = jax.random.split(k)
        bound = 1.0 / float(np.sqrt(H))
        return {
            # stored transposed vs. PyTorch: (E, 3H) and (H, 3H), gates [r|z|n]
            "wih": jax.random.uniform(k1, (E, 3 * H), jnp.float32, -bound, bound),
            "whh": jax.random.uniform(k2, (H, 3 * H), jnp.float32, -bound, bound),
            "bih": jnp.zeros((1, 3 * H), jnp.float32),
            "bhh": jnp.zeros((1, 3 * H), jnp.float32),
        }

    return {
        "embedding": jax.random.normal(ks[0], (vocab_size, E), jnp.float32),
        "obs_encoder": gru_params(ks[1]),
        "look_encoder": gru_params(ks[2]),
        "act_encoder": gru_params(ks[3]),
        "inv_encoder": gru_params(ks[4]),
        "mlp": {
            "w1": kaiming_uniform(ks[5], (4 * H, H), 4 * H),   # hidden1
            "b1": jnp.zeros((1, H), jnp.float32),
            "w2": kaiming_uniform(ks[6], (H, H), H),           # hidden2
            "b2": jnp.zeros((1, H), jnp.float32),
            "wq": kaiming_uniform(ks[7], (H, 1), H),           # Q1
            "bq": jnp.zeros((1, 1), jnp.float32),
        },
        "log_alpha": jnp.asarray(np.log(0.1), jnp.float32),
    }


def prepare_kernel_params(params):
    """Build the fused block-diagonal weights (done once, outside the hot path)."""
    E = params["embedding"].shape[1]
    H = params["mlp"]["w2"].shape[0]
    H4, G = 4 * H, 12 * H
    # encoder blocks: 0=obs, 1=look, 2=inv, 3=act  (matches the z concat order)
    encs = [params["obs_encoder"], params["look_encoder"],
            params["inv_encoder"], params["act_encoder"]]

    wih_blk = jnp.zeros((E, G), jnp.float32)
    whh_blk = jnp.zeros((H4, G), jnp.float32)
    bih_blk = jnp.zeros((1, G), jnp.float32)
    bhh_blk = jnp.zeros((1, G), jnp.float32)
    for e, p in enumerate(encs):
        for g in range(3):                                  # gate-major layout
            dst = slice(g * H4 + e * H, g * H4 + (e + 1) * H)
            src = slice(g * H, (g + 1) * H)
            wih_blk = wih_blk.at[:, dst].set(p["wih"][:, src])
            whh_blk = whh_blk.at[e * H:(e + 1) * H, dst].set(p["whh"][:, src])
            bih_blk = bih_blk.at[:, dst].set(p["bih"][:, src])
            bhh_blk = bhh_blk.at[:, dst].set(p["bhh"][:, src])

    mlp = params["mlp"]
    return {
        "wih_blk": wih_blk.astype(jnp.bfloat16),
        "whh_blk": whh_blk.astype(jnp.bfloat16),
        "bih_blk": bih_blk,
        "bhh_blk": bhh_blk,
        "w1": mlp["w1"].astype(jnp.bfloat16),
        "b1": mlp["b1"],
        "w2": mlp["w2"].astype(jnp.bfloat16),
        "b2": mlp["b2"],
        "wq_row": mlp["wq"].reshape(1, H),
        "bq": mlp["bq"],
    }


# ----------------------------------------------------------------------------
# Forward pass (host glue + single fused pallas_call)
# ----------------------------------------------------------------------------

def double_q_critic_forward(params, kernel_params, state_batch, act_batch):
    obs_seqs = [list(s[0]) for s in state_batch]
    look_seqs = [list(s[1]) for s in state_batch]
    inv_seqs = [list(s[2]) for s in state_batch]
    act_sizes = [len(a) for a in act_batch]
    flat_acts = [list(seq) for acts in act_batch for seq in acts]

    Bs, N = len(state_batch), len(flat_acts)
    seqs = obs_seqs + look_seqs + inv_seqs + flat_acts      # encoder blocks 0..3
    Bp = max(16, _round_up(len(seqs), 16))                  # fill bf16 sublanes
    T = max(1, max(len(s) for s in seqs))
    Tp = max(8, _round_up(T, 8))                            # bucket T (recompiles)
    Np = max(8, _round_up(N, 8))

    # host-side padding + freeze-past-end mask (lengths are Python ints -> static)
    tokens_tm = np.zeros((Tp, Bp), dtype=np.int32)          # time-major
    mask_tm = np.zeros((Tp, Bp), dtype=np.float32)
    for b, s in enumerate(seqs):
        L = len(s)
        if L:
            tokens_tm[:L, b] = np.asarray(s, dtype=np.int32)
            mask_tm[:L, b] = 1.0

    # static one-hot selector: row j of z <- [obs(i_j) | look(i_j) | inv(i_j) | act(j)]
    rep_idx = np.repeat(np.arange(Bs), act_sizes)
    sel = np.zeros((Np, 4 * Bp), dtype=np.float32)
    for j in range(N):
        i = int(rep_idx[j])
        sel[j, 0 * Bp + 0 * Bs + i] = 1.0                   # obs  hidden (cols 0:H)
        sel[j, 1 * Bp + 1 * Bs + i] = 1.0                   # look hidden (cols H:2H)
        sel[j, 2 * Bp + 2 * Bs + i] = 1.0                   # inv  hidden (cols 2H:3H)
        sel[j, 3 * Bp + 3 * Bs + j] = 1.0                   # act  hidden (cols 3H:4H)

    embed = jnp.take(params["embedding"], jnp.asarray(tokens_tm), axis=0)  # (Tp,Bp,E)
    x2d = embed.reshape(Tp * Bp, -1).astype(jnp.bfloat16)   # time-major flattened
    mask2d = jnp.asarray(mask_tm.reshape(Tp * Bp, 1))
    sel = jnp.asarray(sel)

    q_full = run_fused_critic(x2d, mask2d, sel, kernel_params)   # (Np, 128)
    q1 = q_full[:N, 0]

    out, off = [], 0                                        # mirrors torch .split
    for n in act_sizes:
        out.append(q1[off:off + n])
        off += n
    return tuple(out)


# ----------------------------------------------------------------------------
# Main
# ----------------------------------------------------------------------------

if __name__ == "__main__":
    vocab_size, embedding_dim, hidden_dim = 50, 32, 32
    params = init_params(jax.random.PRNGKey(0), vocab_size, embedding_dim,
                         hidden_dim)
    kernel_params = prepare_kernel_params(params)

    rng = np.random.default_rng(0)

    def rand_seq(n):
        return rng.integers(1, vocab_size, size=n).tolist()

    # batch of 2 states; each state = (obs, look, inv) token sequences
    state_batch = [
        (rand_seq(5), rand_seq(4), rand_seq(2)),
        (rand_seq(3), rand_seq(6), rand_seq(7)),
    ]
    # variable number of candidate actions per state
    act_batch = [
        [rand_seq(3), rand_seq(5)],
        [rand_seq(4), rand_seq(2), rand_seq(6)],
    ]

    q1 = double_q_critic_forward(params, kernel_params, state_batch, act_batch)
    q1 = jax.block_until_ready(q1)
    assert len(q1) == 2 and q1[0].shape == (2,) and q1[1].shape == (3,)
    assert all(bool(jnp.all(jnp.isfinite(t))) for t in q1)
    print("KERNEL_OK")
</pallas_src>

<mosaic_0001>
module attributes {stable_mosaic.version = 11 : i64} {
  func.func @fused_critic_kernel(%arg0: memref<128x32xbf16, #tpu.memory_space<vmem>>, %arg1: memref<128x1xf32, #tpu.memory_space<vmem>>, %arg2: memref<32x384xbf16, #tpu.memory_space<vmem>>, %arg3: memref<128x384xbf16, #tpu.memory_space<vmem>>, %arg4: memref<1x384xf32, #tpu.memory_space<vmem>>, %arg5: memref<1x384xf32, #tpu.memory_space<vmem>>, %arg6: memref<8x64xf32, #tpu.memory_space<vmem>>, %arg7: memref<128x32xbf16, #tpu.memory_space<vmem>>, %arg8: memref<1x32xf32, #tpu.memory_space<vmem>>, %arg9: memref<32x32xbf16, #tpu.memory_space<vmem>>, %arg10: memref<1x32xf32, #tpu.memory_space<vmem>>, %arg11: memref<1x32xf32, #tpu.memory_space<vmem>>, %arg12: memref<1x1xf32, #tpu.memory_space<vmem>>, %arg13: memref<8x128xf32, #tpu.memory_space<vmem>>, %arg14: memref<128x384xf32, #tpu.memory_space<vmem>>) attributes {dimension_semantics = [], scalar_prefetch = 0 : i64, scratch_operands = 1 : i64, tpu.core_type = #tpu.core_type<tc>} {
    %c0 = arith.constant 0 : index
    %c0_0 = arith.constant 0 : index
    %0 = vector.load %arg0[%c0, %c0_0] : memref<128x32xbf16, #tpu.memory_space<vmem>>, vector<128x32xbf16>
    %c0_1 = arith.constant 0 : index
    %c0_2 = arith.constant 0 : index
    %1 = vector.load %arg2[%c0_1, %c0_2] : memref<32x384xbf16, #tpu.memory_space<vmem>>, vector<32x384xbf16>
    %cst = arith.constant dense<0.000000e+00> : vector<128x384xf32>
    %2 = tpu.matmul %0, %1, %cst {dimension_numbers = #tpu.dot_dimension_numbers<[1], [0], [0], [1], [0, 0, 1, 1], [], []>} : vector<128x32xbf16>, vector<32x384xbf16>, vector<128x384xf32> -> vector<128x384xf32>
    %c0_3 = arith.constant 0 : index
    %c0_4 = arith.constant 0 : index
    %3 = vector.load %arg4[%c0_3, %c0_4] : memref<1x384xf32, #tpu.memory_space<vmem>>, vector<1x384xf32>
    %4 = vector.broadcast %3 : vector<1x384xf32> to vector<128x384xf32>
    %5 = arith.addf %2, %4 : vector<128x384xf32>
    %c0_5 = arith.constant 0 : index
    %c0_6 = arith.constant 0 : index
    %6 = vector.load %arg14[%c0_5, %c0_6] : memref<128x384xf32, #tpu.memory_space<vmem>>, vector<128x384xf32>
    tpu.vector_store %arg14[%c0_5, %c0_6], %5 {strides = array<i32>} : memref<128x384xf32, #tpu.memory_space<vmem>>, vector<128x384xf32>,
    %c0_7 = arith.constant 0 : index
    %c0_8 = arith.constant 0 : index
    %7 = vector.load %arg5[%c0_7, %c0_8] : memref<1x384xf32, #tpu.memory_space<vmem>>, vector<1x384xf32>
    %cst_9 = arith.constant 0.000000e+00 : f32
    %8 = vector.broadcast %cst_9 : f32 to vector<16x128xf32>
    %c0_i32 = arith.constant 0 : i32
    %c16_i32 = arith.constant 16 : i32
    %9 = arith.muli %c0_i32, %c16_i32 : i32
    %10 = tpu.assume_multiple %9, 16 : i32
    %11 = arith.index_cast %10 : i32 to index
    %c0_10 = arith.constant 0 : index
    %12 = vector.load %arg14[%11, %c0_10] : memref<128x384xf32, #tpu.memory_space<vmem>>, vector<16x384xf32>
    %13 = arith.truncf %8 : vector<16x128xf32> to vector<16x128xbf16>
    %c0_11 = arith.constant 0 : index
    %c0_12 = arith.constant 0 : index
    %14 = vector.load %arg3[%c0_11, %c0_12] : memref<128x384xbf16, #tpu.memory_space<vmem>>, vector<128x384xbf16>
    %cst_13 = arith.constant dense<0.000000e+00> : vector<16x384xf32>
    %15 = tpu.matmul %13, %14, %cst_13 {dimension_numbers = #tpu.dot_dimension_numbers<[1], [0], [0], [1], [0, 0, 1, 1], [], []>} : vector<16x128xbf16>, vector<128x384xbf16>, vector<16x384xf32> -> vector<16x384xf32>
    %16 = vector.broadcast %7 : vector<1x384xf32> to vector<16x384xf32>
    %17 = arith.addf %15, %16 : vector<16x384xf32>
    %18 = vector.extract_strided_slice %12 {offsets = [0, 0], sizes = [16, 128], strides = [1, 1]} : vector<16x384xf32> to vector<16x128xf32>
    %19 = vector.extract_strided_slice %17 {offsets = [0, 0], sizes = [16, 128], strides = [1, 1]} : vector<16x384xf32> to vector<16x128xf32>
    %20 = arith.addf %18, %19 : vector<16x128xf32>
    %21 = arith.negf %20 : vector<16x128xf32>
    %22 = math.exp %21 : vector<16x128xf32>
    %cst_14 = arith.constant 1.000000e+00 : f32
    %23 = vector.broadcast %cst_14 : f32 to vector<16x128xf32>
    %24 = arith.addf %23, %22 : vector<16x128xf32>
    %25 = arith.divf %23, %24 : vector<16x128xf32>
    %26 = vector.extract_strided_slice %12 {offsets = [0, 128], sizes = [16, 128], strides = [1, 1]} : vector<16x384xf32> to vector<16x128xf32>
    %27 = vector.extract_strided_slice %17 {offsets = [0, 128], sizes = [16, 128], strides = [1, 1]} : vector<16x384xf32> to vector<16x128xf32>
    %28 = arith.addf %26, %27 : vector<16x128xf32>
    %29 = arith.negf %28 : vector<16x128xf32>
    %30 = math.exp %29 : vector<16x128xf32>
    %cst_15 = arith.constant 1.000000e+00 : f32
    %31 = vector.broadcast %cst_15 : f32 to vector<16x128xf32>
    %32 = arith.addf %31, %30 : vector<16x128xf32>
    %33 = arith.divf %31, %32 : vector<16x128xf32>
    %34 = vector.extract_strided_slice %12 {offsets = [0, 256], sizes = [16, 128], strides = [1, 1]} : vector<16x384xf32> to vector<16x128xf32>
    %35 = vector.extract_strided_slice %17 {offsets = [0, 256], sizes = [16, 128], strides = [1, 1]} : vector<16x384xf32> to vector<16x128xf32>
    %36 = arith.mulf %25, %35 : vector<16x128xf32>
    %37 = arith.addf %34, %36 : vector<16x128xf32>
    %38 = math.tanh %37 : vector<16x128xf32>
    %cst_16 = arith.constant 1.000000e+00 : f32
    %39 = vector.broadcast %cst_16 : f32 to vector<16x128xf32>
    %40 = arith.subf %39, %33 : vector<16x128xf32>
    %41 = arith.mulf %40, %38 : vector<16x128xf32>
    %42 = arith.mulf %33, %8 : vector<16x128xf32>
    %43 = arith.addf %41, %42 : vector<16x128xf32>
    %44 = arith.index_cast %10 : i32 to index
    %c0_17 = arith.constant 0 : index
    %45 = vector.load %arg1[%44, %c0_17] : memref<128x1xf32, #tpu.memory_space<vmem>>, vector<16x1xf32>
    %46 = arith.subf %43, %8 : vector<16x128xf32>
    %47 = vector.broadcast %45 : vector<16x1xf32> to vector<16x128xf32>
    %48 = arith.mulf %47, %46 : vector<16x128xf32>
    %49 = arith.addf %8, %48 : vector<16x128xf32>
    %c1_i32 = arith.constant 1 : i32
    %c16_i32_18 = arith.constant 16 : i32
    %50 = arith.muli %c1_i32, %c16_i32_18 : i32
    %51 = tpu.assume_multiple %50, 16 : i32
    %52 = arith.index_cast %51 : i32 to index
    %c0_19 = arith.constant 0 : index
    %53 = vector.load %arg14[%52, %c0_19] : memref<128x384xf32, #tpu.memory_space<vmem>>, vector<16x384xf32>
    %54 = arith.truncf %49 : vector<16x128xf32> to vector<16x128xbf16>
    %c0_20 = arith.constant 0 : index
    %c0_21 = arith.constant 0 : index
    %55 = vector.load %arg3[%c0_20, %c0_21] : memref<128x384xbf16, #tpu.memory_space<vmem>>, vector<128x384xbf16>
    %cst_22 = arith.constant dense<0.000000e+00> : vector<16x384xf32>
    %56 = tpu.matmul %54, %55, %cst_22 {dimension_numbers = #tpu.dot_dimension_numbers<[1], [0], [0], [1], [0, 0, 1, 1], [], []>} : vector<16x128xbf16>, vector<128x384xbf16>, vector<16x384xf32> -> vector<16x384xf32>
    %57 = vector.broadcast %7 : vector<1x384xf32> to vector<16x384xf32>
    %58 = arith.addf %56, %57 : vector<16x384xf32>
    %59 = vector.extract_strided_slice %53 {offsets = [0, 0], sizes = [16, 128], strides = [1, 1]} : vector<16x384xf32> to vector<16x128xf32>
    %60 = vector.extract_strided_slice %58 {offsets = [0, 0], sizes = [16, 128], strides = [1, 1]} : vector<16x384xf32> to vector<16x128xf32>
    %61 = arith.addf %59, %60 : vector<16x128xf32>
    %62 = arith.negf %61 : vector<16x128xf32>
    %63 = math.exp %62 : vector<16x128xf32>
    %cst_23 = arith.constant 1.000000e+00 : f32
    %64 = vector.broadcast %cst_23 : f32 to vector<16x128xf32>
    %65 = arith.addf %64, %63 : vector<16x128xf32>
    %66 = arith.divf %64, %65 : vector<16x128xf32>
    %67 = vector.extract_strided_slice %53 {offsets = [0, 128], sizes = [16, 128], strides = [1, 1]} : vector<16x384xf32> to vector<16x128xf32>
    %68 = vector.extract_strided_slice %58 {offsets = [0, 128], sizes = [16, 128], strides = [1, 1]} : vector<16x384xf32> to vector<16x128xf32>
    %69 = arith.addf %67, %68 : vector<16x128xf32>
    %70 = arith.negf %69 : vector<16x128xf32>
    %71 = math.exp %70 : vector<16x128xf32>
    %cst_24 = arith.constant 1.000000e+00 : f32
    %72 = vector.broadcast %cst_24 : f32 to vector<16x128xf32>
    %73 = arith.addf %72, %71 : vector<16x128xf32>
    %74 = arith.divf %72, %73 : vector<16x128xf32>
    %75 = vector.extract_strided_slice %53 {offsets = [0, 256], sizes = [16, 128], strides = [1, 1]} : vector<16x384xf32> to vector<16x128xf32>
    %76 = vector.extract_strided_slice %58 {offsets = [0, 256], sizes = [16, 128], strides = [1, 1]} : vector<16x384xf32> to vector<16x128xf32>
    %77 = arith.mulf %66, %76 : vector<16x128xf32>
    %78 = arith.addf %75, %77 : vector<16x128xf32>
    %79 = math.tanh %78 : vector<16x128xf32>
    %cst_25 = arith.constant 1.000000e+00 : f32
    %80 = vector.broadcast %cst_25 : f32 to vector<16x128xf32>
    %81 = arith.subf %80, %74 : vector<16x128xf32>
    %82 = arith.mulf %81, %79 : vector<16x128xf32>
    %83 = arith.mulf %74, %49 : vector<16x128xf32>
    %84 = arith.addf %82, %83 : vector<16x128xf32>
    %85 = arith.index_cast %51 : i32 to index
    %c0_26 = arith.constant 0 : index
    %86 = vector.load %arg1[%85, %c0_26] : memref<128x1xf32, #tpu.memory_space<vmem>>, vector<16x1xf32>
    %87 = arith.subf %84, %49 : vector<16x128xf32>
    %88 = vector.broadcast %86 : vector<16x1xf32> to vector<16x128xf32>
    %89 = arith.mulf %88, %87 : vector<16x128xf32>
    %90 = arith.addf %49, %89 : vector<16x128xf32>
    %c2_i32 = arith.constant 2 : i32
    %c16_i32_27 = arith.constant 16 : i32
    %91 = arith.muli %c2_i32, %c16_i32_27 : i32
    %92 = tpu.assume_multiple %91, 16 : i32
    %93 = arith.index_cast %92 : i32 to index
    %c0_28 = arith.constant 0 : index
    %94 = vector.load %arg14[%93, %c0_28] : memref<128x384xf32, #tpu.memory_space<vmem>>, vector<16x384xf32>
    %95 = arith.truncf %90 : vector<16x128xf32> to vector<16x128xbf16>
    %c0_29 = arith.constant 0 : index
    %c0_30 = arith.constant 0 : index
    %96 = vector.load %arg3[%c0_29, %c0_30] : memref<128x384xbf16, #tpu.memory_space<vmem>>, vector<128x384xbf16>
    %cst_31 = arith.constant dense<0.000000e+00> : vector<16x384xf32>
    %97 = tpu.matmul %95, %96, %cst_31 {dimension_numbers = #tpu.dot_dimension_numbers<[1], [0], [0], [1], [0, 0, 1, 1], [], []>} : vector<16x128xbf16>, vector<128x384xbf16>, vector<16x384xf32> -> vector<16x384xf32>
    %98 = vector.broadcast %7 : vector<1x384xf32> to vector<16x384xf32>
    %99 = arith.addf %97, %98 : vector<16x384xf32>
    %100 = vector.extract_strided_slice %94 {offsets = [0, 0], sizes = [16, 128], strides = [1, 1]} : vector<16x384xf32> to vector<16x128xf32>
    %101 = vector.extract_strided_slice %99 {offsets = [0, 0], sizes = [16, 128], strides = [1, 1]} : vector<16x384xf32> to vector<16x128xf32>
    %102 = arith.addf %100, %101 : vector<16x128xf32>
    %103 = arith.negf %102 : vector<16x128xf32>
    %104 = math.exp %103 : vector<16x128xf32>
    %cst_32 = arith.constant 1.000000e+00 : f32
    %105 = vector.broadcast %cst_32 : f32 to vector<16x128xf32>
    %106 = arith.addf %105, %104 : vector<16x128xf32>
    %107 = arith.divf %105, %106 : vector<16x128xf32>
    %108 = vector.extract_strided_slice %94 {offsets = [0, 128], sizes = [16, 128], strides = [1, 1]} : vector<16x384xf32> to vector<16x128xf32>
    %109 = vector.extract_strided_slice %99 {offsets = [0, 128], sizes = [16, 128], strides = [1, 1]} : vector<16x384xf32> to vector<16x128xf32>
    %110 = arith.addf %108, %109 : vector<16x128xf32>
    %111 = arith.negf %110 : vector<16x128xf32>
    %112 = math.exp %111 : vector<16x128xf32>
    %cst_33 = arith.constant 1.000000e+00 : f32
    %113 = vector.broadcast %cst_33 : f32 to vector<16x128xf32>
    %114 = arith.addf %113, %112 : vector<16x128xf32>
    %115 = arith.divf %113, %114 : vector<16x128xf32>
    %116 = vector.extract_strided_slice %94 {offsets = [0, 256], sizes = [16, 128], strides = [1, 1]} : vector<16x384xf32> to vector<16x128xf32>
    %117 = vector.extract_strided_slice %99 {offsets = [0, 256], sizes = [16, 128], strides = [1, 1]} : vector<16x384xf32> to vector<16x128xf32>
    %118 = arith.mulf %107, %117 : vector<16x128xf32>
    %119 = arith.addf %116, %118 : vector<16x128xf32>
    %120 = math.tanh %119 : vector<16x128xf32>
    %cst_34 = arith.constant 1.000000e+00 : f32
    %121 = vector.broadcast %cst_34 : f32 to vector<16x128xf32>
    %122 = arith.subf %121, %115 : vector<16x128xf32>
    %123 = arith.mulf %122, %120 : vector<16x128xf32>
    %124 = arith.mulf %115, %90 : vector<16x128xf32>
    %125 = arith.addf %123, %124 : vector<16x128xf32>
    %126 = arith.index_cast %92 : i32 to index
    %c0_35 = arith.constant 0 : index
    %127 = vector.load %arg1[%126, %c0_35] : memref<128x1xf32, #tpu.memory_space<vmem>>, vector<16x1xf32>
    %128 = arith.subf %125, %90 : vector<16x128xf32>
    %129 = vector.broadcast %127 : vector<16x1xf32> to vector<16x128xf32>
    %130 = arith.mulf %129, %128 : vector<16x128xf32>
    %131 = arith.addf %90, %130 : vector<16x128xf32>
    %c3_i32 = arith.constant 3 : i32
    %c16_i32_36 = arith.constant 16 : i32
    %132 = arith.muli %c3_i32, %c16_i32_36 : i32
    %133 = tpu.assume_multiple %132, 16 : i32
    %134 = arith.index_cast %133 : i32 to index
    %c0_37 = arith.constant 0 : index
    %135 = vector.load %arg14[%134, %c0_37] : memref<128x384xf32, #tpu.memory_space<vmem>>, vector<16x384xf32>
    %136 = arith.truncf %131 : vector<16x128xf32> to vector<16x128xbf16>
    %c0_38 = arith.constant 0 : index
    %c0_39 = arith.constant 0 : index
    %137 = vector.load %arg3[%c0_38, %c0_39] : memref<128x384xbf16, #tpu.memory_space<vmem>>, vector<128x384xbf16>
    %cst_40 = arith.constant dense<0.000000e+00> : vector<16x384xf32>
    %138 = tpu.matmul %136, %137, %cst_40 {dimension_numbers = #tpu.dot_dimension_numbers<[1], [0], [0], [1], [0, 0, 1, 1], [], []>} : vector<16x128xbf16>, vector<128x384xbf16>, vector<16x384xf32> -> vector<16x384xf32>
    %139 = vector.broadcast %7 : vector<1x384xf32> to vector<16x384xf32>
    %140 = arith.addf %138, %139 : vector<16x384xf32>
    %141 = vector.extract_strided_slice %135 {offsets = [0, 0], sizes = [16, 128], strides = [1, 1]} : vector<16x384xf32> to vector<16x128xf32>
    %142 = vector.extract_strided_slice %140 {offsets = [0, 0], sizes = [16, 128], strides = [1, 1]} : vector<16x384xf32> to vector<16x128xf32>
    %143 = arith.addf %141, %142 : vector<16x128xf32>
    %144 = arith.negf %143 : vector<16x128xf32>
    %145 = math.exp %144 : vector<16x128xf32>
    %cst_41 = arith.constant 1.000000e+00 : f32
    %146 = vector.broadcast %cst_41 : f32 to vector<16x128xf32>
    %147 = arith.addf %146, %145 : vector<16x128xf32>
    %148 = arith.divf %146, %147 : vector<16x128xf32>
    %149 = vector.extract_strided_slice %135 {offsets = [0, 128], sizes = [16, 128], strides = [1, 1]} : vector<16x384xf32> to vector<16x128xf32>
    %150 = vector.extract_strided_slice %140 {offsets = [0, 128], sizes = [16, 128], strides = [1, 1]} : vector<16x384xf32> to vector<16x128xf32>
    %151 = arith.addf %149, %150 : vector<16x128xf32>
    %152 = arith.negf %151 : vector<16x128xf32>
    %153 = math.exp %152 : vector<16x128xf32>
    %cst_42 = arith.constant 1.000000e+00 : f32
    %154 = vector.broadcast %cst_42 : f32 to vector<16x128xf32>
    %155 = arith.addf %154, %153 : vector<16x128xf32>
    %156 = arith.divf %154, %155 : vector<16x128xf32>
    %157 = vector.extract_strided_slice %135 {offsets = [0, 256], sizes = [16, 128], strides = [1, 1]} : vector<16x384xf32> to vector<16x128xf32>
    %158 = vector.extract_strided_slice %140 {offsets = [0, 256], sizes = [16, 128], strides = [1, 1]} : vector<16x384xf32> to vector<16x128xf32>
    %159 = arith.mulf %148, %158 : vector<16x128xf32>
    %160 = arith.addf %157, %159 : vector<16x128xf32>
    %161 = math.tanh %160 : vector<16x128xf32>
    %cst_43 = arith.constant 1.000000e+00 : f32
    %162 = vector.broadcast %cst_43 : f32 to vector<16x128xf32>
    %163 = arith.subf %162, %156 : vector<16x128xf32>
    %164 = arith.mulf %163, %161 : vector<16x128xf32>
    %165 = arith.mulf %156, %131 : vector<16x128xf32>
    %166 = arith.addf %164, %165 : vector<16x128xf32>
    %167 = arith.index_cast %133 : i32 to index
    %c0_44 = arith.constant 0 : index
    %168 = vector.load %arg1[%167, %c0_44] : memref<128x1xf32, #tpu.memory_space<vmem>>, vector<16x1xf32>
    %169 = arith.subf %166, %131 : vector<16x128xf32>
    %170 = vector.broadcast %168 : vector<16x1xf32> to vector<16x128xf32>
    %171 = arith.mulf %170, %169 : vector<16x128xf32>
    %172 = arith.addf %131, %171 : vector<16x128xf32>
    %c4_i32 = arith.constant 4 : i32
    %c16_i32_45 = arith.constant 16 : i32
    %173 = arith.muli %c4_i32, %c16_i32_45 : i32
    %174 = tpu.assume_multiple %173, 16 : i32
    %175 = arith.index_cast %174 : i32 to index
    %c0_46 = arith.constant 0 : index
    %176 = vector.load %arg14[%175, %c0_46] : memref<128x384xf32, #tpu.memory_space<vmem>>, vector<16x384xf32>
    %177 = arith.truncf %172 : vector<16x128xf32> to vector<16x128xbf16>
    %c0_47 = arith.constant 0 : index
    %c0_48 = arith.constant 0 : index
    %178 = vector.load %arg3[%c0_47, %c0_48] : memref<128x384xbf16, #tpu.memory_space<vmem>>, vector<128x384xbf16>
    %cst_49 = arith.constant dense<0.000000e+00> : vector<16x384xf32>
    %179 = tpu.matmul %177, %178, %cst_49 {dimension_numbers = #tpu.dot_dimension_numbers<[1], [0], [0], [1], [0, 0, 1, 1], [], []>} : vector<16x128xbf16>, vector<128x384xbf16>, vector<16x384xf32> -> vector<16x384xf32>
    %180 = vector.broadcast %7 : vector<1x384xf32> to vector<16x384xf32>
    %181 = arith.addf %179, %180 : vector<16x384xf32>
    %182 = vector.extract_strided_slice %176 {offsets = [0, 0], sizes = [16, 128], strides = [1, 1]} : vector<16x384xf32> to vector<16x128xf32>
    %183 = vector.extract_strided_slice %181 {offsets = [0, 0], sizes = [16, 128], strides = [1, 1]} : vector<16x384xf32> to vector<16x128xf32>
    %184 = arith.addf %182, %183 : vector<16x128xf32>
    %185 = arith.negf %184 : vector<16x128xf32>
    %186 = math.exp %185 : vector<16x128xf32>
    %cst_50 = arith.constant 1.000000e+00 : f32
    %187 = vector.broadcast %cst_50 : f32 to vector<16x128xf32>
    %188 = arith.addf %187, %186 : vector<16x128xf32>
    %189 = arith.divf %187, %188 : vector<16x128xf32>
    %190 = vector.extract_strided_slice %176 {offsets = [0, 128], sizes = [16, 128], strides = [1, 1]} : vector<16x384xf32> to vector<16x128xf32>
    %191 = vector.extract_strided_slice %181 {offsets = [0, 128], sizes = [16, 128], strides = [1, 1]} : vector<16x384xf32> to vector<16x128xf32>
    %192 = arith.addf %190, %191 : vector<16x128xf32>
    %193 = arith.negf %192 : vector<16x128xf32>
    %194 = math.exp %193 : vector<16x128xf32>
    %cst_51 = arith.constant 1.000000e+00 : f32
    %195 = vector.broadcast %cst_51 : f32 to vector<16x128xf32>
    %196 = arith.addf %195, %194 : vector<16x128xf32>
    %197 = arith.divf %195, %196 : vector<16x128xf32>
    %198 = vector.extract_strided_slice %176 {offsets = [0, 256], sizes = [16, 128], strides = [1, 1]} : vector<16x384xf32> to vector<16x128xf32>
    %199 = vector.extract_strided_slice %181 {offsets = [0, 256], sizes = [16, 128], strides = [1, 1]} : vector<16x384xf32> to vector<16x128xf32>
    %200 = arith.mulf %189, %199 : vector<16x128xf32>
    %201 = arith.addf %198, %200 : vector<16x128xf32>
    %202 = math.tanh %201 : vector<16x128xf32>
    %cst_52 = arith.constant 1.000000e+00 : f32
    %203 = vector.broadcast %cst_52 : f32 to vector<16x128xf32>
    %204 = arith.subf %203, %197 : vector<16x128xf32>
    %205 = arith.mulf %204, %202 : vector<16x128xf32>
    %206 = arith.mulf %197, %172 : vector<16x128xf32>
    %207 = arith.addf %205, %206 : vector<16x128xf32>
    %208 = arith.index_cast %174 : i32 to index
    %c0_53 = arith.constant 0 : index
    %209 = vector.load %arg1[%208, %c0_53] : memref<128x1xf32, #tpu.memory_space<vmem>>, vector<16x1xf32>
    %210 = arith.subf %207, %172 : vector<16x128xf32>
    %211 = vector.broadcast %209 : vector<16x1xf32> to vector<16x128xf32>
    %212 = arith.mulf %211, %210 : vector<16x128xf32>
    %213 = arith.addf %172, %212 : vector<16x128xf32>
    %c5_i32 = arith.constant 5 : i32
    %c16_i32_54 = arith.constant 16 : i32
    %214 = arith.muli %c5_i32, %c16_i32_54 : i32
    %215 = tpu.assume_multiple %214, 16 : i32
    %216 = arith.index_cast %215 : i32 to index
    %c0_55 = arith.constant 0 : index
    %217 = vector.load %arg14[%216, %c0_55] : memref<128x384xf32, #tpu.memory_space<vmem>>, vector<16x384xf32>
    %218 = arith.truncf %213 : vector<16x128xf32> to vector<16x128xbf16>
    %c0_56 = arith.constant 0 : index
    %c0_57 = arith.constant 0 : index
    %219 = vector.load %arg3[%c0_56, %c0_57] : memref<128x384xbf16, #tpu.memory_space<vmem>>, vector<128x384xbf16>
    %cst_58 = arith.constant dense<0.000000e+00> : vector<16x384xf32>
    %220 = tpu.matmul %218, %219, %cst_58 {dimension_numbers = #tpu.dot_dimension_numbers<[1], [0], [0], [1], [0, 0, 1, 1], [], []>} : vector<16x128xbf16>, vector<128x384xbf16>, vector<16x384xf32> -> vector<16x384xf32>
    %221 = vector.broadcast %7 : vector<1x384xf32> to vector<16x384xf32>
    %222 = arith.addf %220, %221 : vector<16x384xf32>
    %223 = vector.extract_strided_slice %217 {offsets = [0, 0], sizes = [16, 128], strides = [1, 1]} : vector<16x384xf32> to vector<16x128xf32>
    %224 = vector.extract_strided_slice %222 {offsets = [0, 0], sizes = [16, 128], strides = [1, 1]} : vector<16x384xf32> to vector<16x128xf32>
    %225 = arith.addf %223, %224 : vector<16x128xf32>
    %226 = arith.negf %225 : vector<16x128xf32>
    %227 = math.exp %226 : vector<16x128xf32>
    %cst_59 = arith.constant 1.000000e+00 : f32
    %228 = vector.broadcast %cst_59 : f32 to vector<16x128xf32>
    %229 = arith.addf %228, %227 : vector<16x128xf32>
    %230 = arith.divf %228, %229 : vector<16x128xf32>
    %231 = vector.extract_strided_slice %217 {offsets = [0, 128], sizes = [16, 128], strides = [1, 1]} : vector<16x384xf32> to vector<16x128xf32>
    %232 = vector.extract_strided_slice %222 {offsets = [0, 128], sizes = [16, 128], strides = [1, 1]} : vector<16x384xf32> to vector<16x128xf32>
    %233 = arith.addf %231, %232 : vector<16x128xf32>
    %234 = arith.negf %233 : vector<16x128xf32>
    %235 = math.exp %234 : vector<16x128xf32>
    %cst_60 = arith.constant 1.000000e+00 : f32
    %236 = vector.broadcast %cst_60 : f32 to vector<16x128xf32>
    %237 = arith.addf %236, %235 : vector<16x128xf32>
    %238 = arith.divf %236, %237 : vector<16x128xf32>
    %239 = vector.extract_strided_slice %217 {offsets = [0, 256], sizes = [16, 128], strides = [1, 1]} : vector<16x384xf32> to vector<16x128xf32>
    %240 = vector.extract_strided_slice %222 {offsets = [0, 256], sizes = [16, 128], strides = [1, 1]} : vector<16x384xf32> to vector<16x128xf32>
    %241 = arith.mulf %230, %240 : vector<16x128xf32>
    %242 = arith.addf %239, %241 : vector<16x128xf32>
    %243 = math.tanh %242 : vector<16x128xf32>
    %cst_61 = arith.constant 1.000000e+00 : f32
    %244 = vector.broadcast %cst_61 : f32 to vector<16x128xf32>
    %245 = arith.subf %244, %238 : vector<16x128xf32>
    %246 = arith.mulf %245, %243 : vector<16x128xf32>
    %247 = arith.mulf %238, %213 : vector<16x128xf32>
    %248 = arith.addf %246, %247 : vector<16x128xf32>
    %249 = arith.index_cast %215 : i32 to index
    %c0_62 = arith.constant 0 : index
    %250 = vector.load %arg1[%249, %c0_62] : memref<128x1xf32, #tpu.memory_space<vmem>>, vector<16x1xf32>
    %251 = arith.subf %248, %213 : vector<16x128xf32>
    %252 = vector.broadcast %250 : vector<16x1xf32> to vector<16x128xf32>
    %253 = arith.mulf %252, %251 : vector<16x128xf32>
    %254 = arith.addf %213, %253 : vector<16x128xf32>
    %c6_i32 = arith.constant 6 : i32
    %c16_i32_63 = arith.constant 16 : i32
    %255 = arith.muli %c6_i32, %c16_i32_63 : i32
    %256 = tpu.assume_multiple %255, 16 : i32
    %257 = arith.index_cast %256 : i32 to index
    %c0_64 = arith.constant 0 : index
    %258 = vector.load %arg14[%257, %c0_64] : memref<128x384xf32, #tpu.memory_space<vmem>>, vector<16x384xf32>
    %259 = arith.truncf %254 : vector<16x128xf32> to vector<16x128xbf16>
    %c0_65 = arith.constant 0 : index
    %c0_66 = arith.constant 0 : index
    %260 = vector.load %arg3[%c0_65, %c0_66] : memref<128x384xbf16, #tpu.memory_space<vmem>>, vector<128x384xbf16>
    %cst_67 = arith.constant dense<0.000000e+00> : vector<16x384xf32>
    %261 = tpu.matmul %259, %260, %cst_67 {dimension_numbers = #tpu.dot_dimension_numbers<[1], [0], [0], [1], [0, 0, 1, 1], [], []>} : vector<16x128xbf16>, vector<128x384xbf16>, vector<16x384xf32> -> vector<16x384xf32>
    %262 = vector.broadcast %7 : vector<1x384xf32> to vector<16x384xf32>
    %263 = arith.addf %261, %262 : vector<16x384xf32>
    %264 = vector.extract_strided_slice %258 {offsets = [0, 0], sizes = [16, 128], strides = [1, 1]} : vector<16x384xf32> to vector<16x128xf32>
    %265 = vector.extract_strided_slice %263 {offsets = [0, 0], sizes = [16, 128], strides = [1, 1]} : vector<16x384xf32> to vector<16x128xf32>
    %266 = arith.addf %264, %265 : vector<16x128xf32>
    %267 = arith.negf %266 : vector<16x128xf32>
    %268 = math.exp %267 : vector<16x128xf32>
    %cst_68 = arith.constant 1.000000e+00 : f32
    %269 = vector.broadcast %cst_68 : f32 to vector<16x128xf32>
    %270 = arith.addf %269, %268 : vector<16x128xf32>
    %271 = arith.divf %269, %270 : vector<16x128xf32>
    %272 = vector.extract_strided_slice %258 {offsets = [0, 128], sizes = [16, 128], strides = [1, 1]} : vector<16x384xf32> to vector<16x128xf32>
    %273 = vector.extract_strided_slice %263 {offsets = [0, 128], sizes = [16, 128], strides = [1, 1]} : vector<16x384xf32> to vector<16x128xf32>
    %274 = arith.addf %272, %273 : vector<16x128xf32>
    %275 = arith.negf %274 : vector<16x128xf32>
    %276 = math.exp %275 : vector<16x128xf32>
    %cst_69 = arith.constant 1.000000e+00 : f32
    %277 = vector.broadcast %cst_69 : f32 to vector<16x128xf32>
    %278 = arith.addf %277, %276 : vector<16x128xf32>
    %279 = arith.divf %277, %278 : vector<16x128xf32>
    %280 = vector.extract_strided_slice %258 {offsets = [0, 256], sizes = [16, 128], strides = [1, 1]} : vector<16x384xf32> to vector<16x128xf32>
    %281 = vector.extract_strided_slice %263 {offsets = [0, 256], sizes = [16, 128], strides = [1, 1]} : vector<16x384xf32> to vector<16x128xf32>
    %282 = arith.mulf %271, %281 : vector<16x128xf32>
    %283 = arith.addf %280, %282 : vector<16x128xf32>
    %284 = math.tanh %283 : vector<16x128xf32>
    %cst_70 = arith.constant 1.000000e+00 : f32
    %285 = vector.broadcast %cst_70 : f32 to vector<16x128xf32>
    %286 = arith.subf %285, %279 : vector<16x128xf32>
    %287 = arith.mulf %286, %284 : vector<16x128xf32>
    %288 = arith.mulf %279, %254 : vector<16x128xf32>
    %289 = arith.addf %287, %288 : vector<16x128xf32>
    %290 = arith.index_cast %256 : i32 to index
    %c0_71 = arith.constant 0 : index
    %291 = vector.load %arg1[%290, %c0_71] : memref<128x1xf32, #tpu.memory_space<vmem>>, vector<16x1xf32>
    %292 = arith.subf %289, %254 : vector<16x128xf32>
    %293 = vector.broadcast %291 : vector<16x1xf32> to vector<16x128xf32>
    %294 = arith.mulf %293, %292 : vector<16x128xf32>
    %295 = arith.addf %254, %294 : vector<16x128xf32>
    %c7_i32 = arith.constant 7 : i32
    %c16_i32_72 = arith.constant 16 : i32
    %296 = arith.muli %c7_i32, %c16_i32_72 : i32
    %297 = tpu.assume_multiple %296, 16 : i32
    %298 = arith.index_cast %297 : i32 to index
    %c0_73 = arith.constant 0 : index
    %299 = vector.load %arg14[%298, %c0_73] : memref<128x384xf32, #tpu.memory_space<vmem>>, vector<16x384xf32>
    %300 = arith.truncf %295 : vector<16x128xf32> to vector<16x128xbf16>
    %c0_74 = arith.constant 0 : index
    %c0_75 = arith.constant 0 : index
    %301 = vector.load %arg3[%c0_74, %c0_75] : memref<128x384xbf16, #tpu.memory_space<vmem>>, vector<128x384xbf16>
    %cst_76 = arith.constant dense<0.000000e+00> : vector<16x384xf32>
    %302 = tpu.matmul %300, %301, %cst_76 {dimension_numbers = #tpu.dot_dimension_numbers<[1], [0], [0], [1], [0, 0, 1, 1], [], []>} : vector<16x128xbf16>, vector<128x384xbf16>, vector<16x384xf32> -> vector<16x384xf32>
    %303 = vector.broadcast %7 : vector<1x384xf32> to vector<16x384xf32>
    %304 = arith.addf %302, %303 : vector<16x384xf32>
    %305 = vector.extract_strided_slice %299 {offsets = [0, 0], sizes = [16, 128], strides = [1, 1]} : vector<16x384xf32> to vector<16x128xf32>
    %306 = vector.extract_strided_slice %304 {offsets = [0, 0], sizes = [16, 128], strides = [1, 1]} : vector<16x384xf32> to vector<16x128xf32>
    %307 = arith.addf %305, %306 : vector<16x128xf32>
    %308 = arith.negf %307 : vector<16x128xf32>
    %309 = math.exp %308 : vector<16x128xf32>
    %cst_77 = arith.constant 1.000000e+00 : f32
    %310 = vector.broadcast %cst_77 : f32 to vector<16x128xf32>
    %311 = arith.addf %310, %309 : vector<16x128xf32>
    %312 = arith.divf %310, %311 : vector<16x128xf32>
    %313 = vector.extract_strided_slice %299 {offsets = [0, 128], sizes = [16, 128], strides = [1, 1]} : vector<16x384xf32> to vector<16x128xf32>
    %314 = vector.extract_strided_slice %304 {offsets = [0, 128], sizes = [16, 128], strides = [1, 1]} : vector<16x384xf32> to vector<16x128xf32>
    %315 = arith.addf %313, %314 : vector<16x128xf32>
    %316 = arith.negf %315 : vector<16x128xf32>
    %317 = math.exp %316 : vector<16x128xf32>
    %cst_78 = arith.constant 1.000000e+00 : f32
    %318 = vector.broadcast %cst_78 : f32 to vector<16x128xf32>
    %319 = arith.addf %318, %317 : vector<16x128xf32>
    %320 = arith.divf %318, %319 : vector<16x128xf32>
    %321 = vector.extract_strided_slice %299 {offsets = [0, 256], sizes = [16, 128], strides = [1, 1]} : vector<16x384xf32> to vector<16x128xf32>
    %322 = vector.extract_strided_slice %304 {offsets = [0, 256], sizes = [16, 128], strides = [1, 1]} : vector<16x384xf32> to vector<16x128xf32>
    %323 = arith.mulf %312, %322 : vector<16x128xf32>
    %324 = arith.addf %321, %323 : vector<16x128xf32>
    %325 = math.tanh %324 : vector<16x128xf32>
    %cst_79 = arith.constant 1.000000e+00 : f32
    %326 = vector.broadcast %cst_79 : f32 to vector<16x128xf32>
    %327 = arith.subf %326, %320 : vector<16x128xf32>
    %328 = arith.mulf %327, %325 : vector<16x128xf32>
    %329 = arith.mulf %320, %295 : vector<16x128xf32>
    %330 = arith.addf %328, %329 : vector<16x128xf32>
    %331 = arith.index_cast %297 : i32 to index
    %c0_80 = arith.constant 0 : index
    %332 = vector.load %arg1[%331, %c0_80] : memref<128x1xf32, #tpu.memory_space<vmem>>, vector<16x1xf32>
    %333 = arith.subf %330, %295 : vector<16x128xf32>
    %334 = vector.broadcast %332 : vector<16x1xf32> to vector<16x128xf32>
    %335 = arith.mulf %334, %333 : vector<16x128xf32>
    %336 = arith.addf %295, %335 : vector<16x128xf32>
    %c8_i32 = arith.constant 8 : i32
    %337 = tpu.iota {dimensions = array<i32: 1>} : vector<1x128xi32>
    %c0_i32_81 = arith.constant 0 : i32
    %338 = vector.broadcast %c0_i32_81 : i32 to vector<1x128xi32>
    %339 = arith.cmpi sge, %337, %338 : vector<1x128xi32>
    %c32_i32 = arith.constant 32 : i32
    %340 = vector.broadcast %c32_i32 : i32 to vector<1x128xi32>
    %341 = arith.cmpi slt, %337, %340 : vector<1x128xi32>
    %342 = arith.andi %339, %341 : vector<1x128xi1>
    %343 = arith.extui %342 : vector<1x128xi1> to vector<1x128xi32>
    %344 = arith.sitofp %343 : vector<1x128xi32> to vector<1x128xf32>
    %345 = vector.broadcast %344 : vector<1x128xf32> to vector<16x128xf32>
    %346 = arith.mulf %336, %345 : vector<16x128xf32>
    %c32_i32_82 = arith.constant 32 : i32
    %347 = vector.broadcast %c32_i32_82 : i32 to vector<1x128xi32>
    %348 = arith.cmpi sge, %337, %347 : vector<1x128xi32>
    %c64_i32 = arith.constant 64 : i32
    %349 = vector.broadcast %c64_i32 : i32 to vector<1x128xi32>
    %350 = arith.cmpi slt, %337, %349 : vector<1x128xi32>
    %351 = arith.andi %348, %350 : vector<1x128xi1>
    %352 = arith.extui %351 : vector<1x128xi1> to vector<1x128xi32>
    %353 = arith.sitofp %352 : vector<1x128xi32> to vector<1x128xf32>
    %354 = vector.broadcast %353 : vector<1x128xf32> to vector<16x128xf32>
    %355 = arith.mulf %336, %354 : vector<16x128xf32>
    %c64_i32_83 = arith.constant 64 : i32
    %356 = vector.broadcast %c64_i32_83 : i32 to vector<1x128xi32>
    %357 = arith.cmpi sge, %337, %356 : vector<1x128xi32>
    %c96_i32 = arith.constant 96 : i32
    %358 = vector.broadcast %c96_i32 : i32 to vector<1x128xi32>
    %359 = arith.cmpi slt, %337, %358 : vector<1x128xi32>
    %360 = arith.andi %357, %359 : vector<1x128xi1>
    %361 = arith.extui %360 : vector<1x128xi1> to vector<1x128xi32>
    %362 = arith.sitofp %361 : vector<1x128xi32> to vector<1x128xf32>
    %363 = vector.broadcast %362 : vector<1x128xf32> to vector<16x128xf32>
    %364 = arith.mulf %336, %363 : vector<16x128xf32>
    %c96_i32_84 = arith.constant 96 : i32
    %365 = vector.broadcast %c96_i32_84 : i32 to vector<1x128xi32>
    %366 = arith.cmpi sge, %337, %365 : vector<1x128xi32>
    %c128_i32 = arith.constant 128 : i32
    %367 = vector.broadcast %c128_i32 : i32 to vector<1x128xi32>
    %368 = arith.cmpi slt, %337, %367 : vector<1x128xi32>
    %369 = arith.andi %366, %368 : vector<1x128xi1>
    %370 = arith.extui %369 : vector<1x128xi1> to vector<1x128xi32>
    %371 = arith.sitofp %370 : vector<1x128xi32> to vector<1x128xf32>
    %372 = vector.broadcast %371 : vector<1x128xf32> to vector<16x128xf32>
    %373 = arith.mulf %336, %372 : vector<16x128xf32>
    %374 = tpu.concatenate %346, %355, %364, %373 in 0 : vector<16x128xf32>, vector<16x128xf32>, vector<16x128xf32>, vector<16x128xf32> -> vector<64x128xf32>
    %c0_85 = arith.constant 0 : index
    %c0_86 = arith.constant 0 : index
    %375 = vector.load %arg6[%c0_85, %c0_86] : memref<8x64xf32, #tpu.memory_space<vmem>>, vector<8x64xf32>
    %cst_87 = arith.constant dense<0.000000e+00> : vector<8x128xf32>
    %376 = tpu.matmul %375, %374, %cst_87 {dimension_numbers = #tpu.dot_dimension_numbers<[1], [0], [0], [1], [0, 0, 1, 1], [], []>} : vector<8x64xf32>, vector<64x128xf32>, vector<8x128xf32> -> vector<8x128xf32>
    %377 = arith.truncf %376 : vector<8x128xf32> to vector<8x128xbf16>
    %c0_88 = arith.constant 0 : index
    %c0_89 = arith.constant 0 : index
    %378 = vector.load %arg7[%c0_88, %c0_89] : memref<128x32xbf16, #tpu.memory_space<vmem>>, vector<128x32xbf16>
    %cst_90 = arith.constant dense<0.000000e+00> : vector<8x32xf32>
    %379 = tpu.matmul %377, %378, %cst_90 {dimension_numbers = #tpu.dot_dimension_numbers<[1], [0], [0], [1], [0, 0, 1, 1], [], []>} : vector<8x128xbf16>, vector<128x32xbf16>, vector<8x32xf32> -> vector<8x32xf32>
    %c0_91 = arith.constant 0 : index
    %c0_92 = arith.constant 0 : index
    %380 = vector.load %arg8[%c0_91, %c0_92] : memref<1x32xf32, #tpu.memory_space<vmem>>, vector<1x32xf32>
    %381 = vector.broadcast %380 : vector<1x32xf32> to vector<8x32xf32>
    %382 = arith.addf %379, %381 : vector<8x32xf32>
    %cst_93 = arith.constant 0.000000e+00 : f32
    %383 = vector.broadcast %cst_93 : f32 to vector<8x32xf32>
    %384 = arith.maximumf %382, %383 : vector<8x32xf32>
    %385 = arith.truncf %384 : vector<8x32xf32> to vector<8x32xbf16>
    %c0_94 = arith.constant 0 : index
    %c0_95 = arith.constant 0 : index
    %386 = vector.load %arg9[%c0_94, %c0_95] : memref<32x32xbf16, #tpu.memory_space<vmem>>, vector<32x32xbf16>
    %cst_96 = arith.constant dense<0.000000e+00> : vector<8x32xf32>
    %387 = tpu.matmul %385, %386, %cst_96 {dimension_numbers = #tpu.dot_dimension_numbers<[1], [0], [0], [1], [0, 0, 1, 1], [], []>} : vector<8x32xbf16>, vector<32x32xbf16>, vector<8x32xf32> -> vector<8x32xf32>
    %c0_97 = arith.constant 0 : index
    %c0_98 = arith.constant 0 : index
    %388 = vector.load %arg10[%c0_97, %c0_98] : memref<1x32xf32, #tpu.memory_space<vmem>>, vector<1x32xf32>
    %389 = vector.broadcast %388 : vector<1x32xf32> to vector<8x32xf32>
    %390 = arith.addf %387, %389 : vector<8x32xf32>
    %cst_99 = arith.constant 0.000000e+00 : f32
    %391 = vector.broadcast %cst_99 : f32 to vector<8x32xf32>
    %392 = arith.maximumf %390, %391 : vector<8x32xf32>
    %c0_100 = arith.constant 0 : index
    %c0_101 = arith.constant 0 : index
    %393 = vector.load %arg11[%c0_100, %c0_101] : memref<1x32xf32, #tpu.memory_space<vmem>>, vector<1x32xf32>
    %394 = vector.broadcast %393 : vector<1x32xf32> to vector<8x32xf32>
    %395 = arith.mulf %392, %394 : vector<8x32xf32>
    %cst_102 = arith.constant dense<0.000000e+00> : vector<8xf32>
    %396 = vector.multi_reduction <add>, %395, %cst_102 [1] : vector<8x32xf32> to vector<8xf32>
    %397 = vector.shape_cast %396 : vector<8xf32> to vector<8x1xf32>
    %c0_103 = arith.constant 0 : index
    %c0_104 = arith.constant 0 : index
    %398 = vector.load %arg12[%c0_103, %c0_104] : memref<1x1xf32, #tpu.memory_space<vmem>>, vector<1x1xf32>
    %399 = vector.broadcast %398 : vector<1x1xf32> to vector<8x1xf32>
    %400 = arith.addf %397, %399 : vector<8x1xf32>
    %401 = vector.shape_cast %400 : vector<8x1xf32> to vector<8x1xf32>
    %402 = vector.broadcast %401 : vector<8x1xf32> to vector<8x128xf32>
    %c0_105 = arith.constant 0 : index
    %c0_106 = arith.constant 0 : index
    %403 = vector.load %arg13[%c0_105, %c0_106] : memref<8x128xf32, #tpu.memory_space<vmem>>, vector<8x128xf32>
    tpu.vector_store %arg13[%c0_105, %c0_106], %402 {strides = array<i32>} : memref<8x128xf32, #tpu.memory_space<vmem>>, vector<8x128xf32>,
    return
  }
}

</mosaic_0001>

<llo_original>
// kernel: tpu_custom_call.1
$region0: #{tpu_custom_call.1}
  #allocation0 [shape = 'u32[]', space=smem, size = 0x4, offset = 0x4, fixed_abs, tag = 'smem constant byte address 0x4 - core index']
  #allocation1 [shape = 'u32[144,128]{1,0:T(1,128)}', space=vmem, size = 0x12000, scoped, tag = 'internal scratch']
  #allocation2 [shape = 'f32[128,384]{1,0:T(8,128)}', space=vmem, size = 0x30000, scoped, tag = 'scratch operand']
  #allocation3 [shape = 'f32[1,1]{1,0:T(1,128)S(1)}', space=vmem, size = 0x200, scoped, tag = 'scoped memory for tpu_custom_call.1']
  %s0 = inlined_call_operand.vmem [shape: bf16[128,32], index: 0, kind: input, shape index: {}]
  %s1 = inlined_call_operand.vmem [shape: f32[128,1], index: 1, kind: input, shape index: {}]
  %s2 = inlined_call_operand.vmem [shape: bf16[32,384], index: 2, kind: input, shape index: {}]
  %s3 = inlined_call_operand.vmem [shape: bf16[128,384], index: 3, kind: input, shape index: {}]
  %s4 = inlined_call_operand.vmem [shape: f32[1,384], index: 4, kind: input, shape index: {}]
  %s5 = inlined_call_operand.vmem [shape: f32[1,384], index: 5, kind: input, shape index: {}]
  %s6 = inlined_call_operand.vmem [shape: f32[8,64], index: 6, kind: input, shape index: {}]
  %s7 = inlined_call_operand.vmem [shape: bf16[128,32], index: 7, kind: input, shape index: {}]
  %s8 = inlined_call_operand.vmem [shape: f32[1,32], index: 8, kind: input, shape index: {}]
  %s9 = inlined_call_operand.vmem [shape: bf16[32,32], index: 9, kind: input, shape index: {}]
  %s10 = inlined_call_operand.vmem [shape: f32[1,32], index: 10, kind: input, shape index: {}]
  %s11 = inlined_call_operand.vmem [shape: f32[1,32], index: 11, kind: input, shape index: {}]
  %s12 = inlined_call_operand.<no memory space> [shape: f32[1,1], index: 12, kind: input, shape index: {}]
  %s13 = inlined_call_operand.hbm [shape: f32[8,128], index: 13, kind: output, shape index: {}]
  %s14 = sld [smem:[#allocation0]]
  $region62: #{tpu_custom_call.1} parent=0
    _
  %s16 = ssub.s32 1, %s14
  %s17 = scalar_select 0, %s16, %s14
  %v18 = vstv %s12
  %19 = vst [vmem:[#allocation3] sm:$0x1] %v18
  $region1: #{tpu_custom_call.1} parent=0
    #allocation4 [shape = 'u8[4096]{0}', space=vmem, size = 0x1000, scoped, tag = 'output window, operand 0, single buffered']
    #allocation5 [shape = 's32[1]{0}', space=sflag, size = 0x4, scoped, tag = 'scoped memory for tpu_custom_call.1']
    %20 = vsyncpa [#allocation5], 0
    // Predicated region
    $region2: #{tpu_custom_call.1} parent=1 // pred_check
      _
    $region3: #{tpu_custom_call.1} parent=1 // pred_check_branch
      %22 = sbr.rel (0) target = $region5
    $region4: #{tpu_custom_call.1} parent=1 // pred_region
      _
    $region5: #{tpu_custom_call.1} parent=1 // pred_fallthru
      _
    // Predicated region
    $region6: #{tpu_custom_call.1} parent=1 // pred_check
      _
    $region7: #{tpu_custom_call.1} parent=1 // pred_check_branch
      %24 = sbr.rel (0) target = $region9
    $region8: #{tpu_custom_call.1} parent=1 // pred_region
      _
    $region9: #{tpu_custom_call.1} parent=1 // pred_fallthru
      _
    // Predicated region
    $region10: #{tpu_custom_call.1} parent=1 // pred_check
      _
    $region11: #{tpu_custom_call.1} parent=1 // pred_check_branch
      %26 = sbr.rel (0) target = $region13
    $region12: #{tpu_custom_call.1} parent=1 // pred_region
      _
    $region13: #{tpu_custom_call.1} parent=1 // pred_fallthru
      _
    // Predicated region
    $region14: #{tpu_custom_call.1} parent=1 // pred_check
      _
    $region15: #{tpu_custom_call.1} parent=1 // pred_check_branch
      %28 = sbr.rel (0) target = $region17
    $region16: #{tpu_custom_call.1} parent=1 // pred_region
      _
    $region17: #{tpu_custom_call.1} parent=1 // pred_fallthru
      _
    // Predicated region
    $region18: #{tpu_custom_call.1} parent=1 // pred_check
      _
    $region19: #{tpu_custom_call.1} parent=1 // pred_check_branch
      %30 = sbr.rel (0) target = $region21
    $region20: #{tpu_custom_call.1} parent=1 // pred_region
      _
    $region21: #{tpu_custom_call.1} parent=1 // pred_fallthru
      _
    // Predicated region
    $region22: #{tpu_custom_call.1} parent=1 // pred_check
      _
    $region23: #{tpu_custom_call.1} parent=1 // pred_check_branch
      %32 = sbr.rel (0) target = $region25
    $region24: #{tpu_custom_call.1} parent=1 // pred_region
      _
    $region25: #{tpu_custom_call.1} parent=1 // pred_fallthru
      _
    // Predicated region
    $region26: #{tpu_custom_call.1} parent=1 // pred_check
      _
    $region27: #{tpu_custom_call.1} parent=1 // pred_check_branch
      %34 = sbr.rel (0) target = $region29
    $region28: #{tpu_custom_call.1} parent=1 // pred_region
      _
    $region29: #{tpu_custom_call.1} parent=1 // pred_fallthru
      _
    // Predicated region
    $region30: #{tpu_custom_call.1} parent=1 // pred_check
      _
    $region31: #{tpu_custom_call.1} parent=1 // pred_check_branch
      %36 = sbr.rel (0) target = $region33
    $region32: #{tpu_custom_call.1} parent=1 // pred_region
      _
    $region33: #{tpu_custom_call.1} parent=1 // pred_fallthru
      _
    // Predicated region
    $region34: #{tpu_custom_call.1} parent=1 // pred_check
      _
    $region35: #{tpu_custom_call.1} parent=1 // pred_check_branch
      %38 = sbr.rel (0) target = $region37
    $region36: #{tpu_custom_call.1} parent=1 // pred_region
      _
    $region37: #{tpu_custom_call.1} parent=1 // pred_fallthru
      _
    // Predicated region
    $region38: #{tpu_custom_call.1} parent=1 // pred_check
      _
    $region39: #{tpu_custom_call.1} parent=1 // pred_check_branch
      %40 = sbr.rel (0) target = $region41
    $region40: #{tpu_custom_call.1} parent=1 // pred_region
      _
    $region41: #{tpu_custom_call.1} parent=1 // pred_fallthru
      _
    // Predicated region
    $region42: #{tpu_custom_call.1} parent=1 // pred_check
      _
    $region43: #{tpu_custom_call.1} parent=1 // pred_check_branch
      %42 = sbr.rel (0) target = $region45
    $region44: #{tpu_custom_call.1} parent=1 // pred_region
      _
    $region45: #{tpu_custom_call.1} parent=1 // pred_fallthru
      _
    // Predicated region
    $region46: #{tpu_custom_call.1} parent=1 // pred_check
      _
    $region47: #{tpu_custom_call.1} parent=1 // pred_check_branch
      %44 = sbr.rel (0) target = $region49
    $region48: #{tpu_custom_call.1} parent=1 // pred_region
      _
    $region49: #{tpu_custom_call.1} parent=1 // pred_fallthru
      _
    // Predicated region
    $region50: #{tpu_custom_call.1} parent=1 // pred_check
      _
    $region51: #{tpu_custom_call.1} parent=1 // pred_check_branch
      %46 = sbr.rel (0) target = $region53
    $region52: #{tpu_custom_call.1} parent=1 // pred_region
      _
    $region53: #{tpu_custom_call.1} parent=1 // pred_fallthru
      _
    %v48 = vld [vmem:[%s0] sm:$0xf]
    %v49 = vld [vmem:[%s0 + $0x4] sm:$0xf]
    %v50 = vld [vmem:[%s0 + $0x8] sm:$0xf]
    %v51 = vld [vmem:[%s0 + $0xc] sm:$0xf]
    %v52 = vld [vmem:[%s0 + $0x10] sm:$0xf]
    %v53 = vld [vmem:[%s0 + $0x14] sm:$0xf]
    %v54 = vld [vmem:[%s0 + $0x18] sm:$0xf]
    %v55 = vld [vmem:[%s0 + $0x1c] sm:$0xf]
    %v56 = vld [vmem:[%s0 + $0x20] sm:$0xf]
    %v57 = vld [vmem:[%s0 + $0x24] sm:$0xf]
    %v58 = vld [vmem:[%s0 + $0x28] sm:$0xf]
    %v59 = vld [vmem:[%s0 + $0x2c] sm:$0xf]
    %v60 = vld [vmem:[%s0 + $0x30] sm:$0xf]
    %v61 = vld [vmem:[%s0 + $0x34] sm:$0xf]
    %v62 = vld [vmem:[%s0 + $0x38] sm:$0xf]
    %v63 = vld [vmem:[%s0 + $0x3c] sm:$0xf]
    %v64 = vld [vmem:[%s2] sm:$0xff]
    %v65 = vld [vmem:[%s2 + $0x8] sm:$0xf]
    %v66 = vld [vmem:[%s2 + $0xc] sm:$0xff]
    %v67 = vld [vmem:[%s2 + $0x14] sm:$0xf]
    %v68 = vld [vmem:[%s2 + $0x18] sm:$0xff]
    %v69 = vld [vmem:[%s2 + $0x20] sm:$0xf]
    %v70 = vld [vmem:[%s2 + $0x24] sm:$0xff]
    %v71 = vld [vmem:[%s2 + $0x2c] sm:$0xf]
    %v72 = vld [vmem:[%s4] sm:$0x7]
    %v74 = vlaneseq
    %v75 = vshrl.u32 %v74, 7
    %v76 = vsub.s32 0, %v75
    %v77 = vrot.slane %v72, %v76
    %v78 = vlaneseq
    %v79 = vshrl.u32 %v78, 7
    %v80 = vsub.s32 1, %v79
    %v81 = vrot.slane %v72, %v80
    %v82 = vlaneseq
    %v83 = vshrl.u32 %v82, 7
    %v84 = vsub.s32 2, %v83
    %v85 = vrot.slane %v72, %v84
    %v105 = vunpack.c.l.b16 %v48
    %v106 = vunpack.c.l.b16 %v49
    %v107 = vunpack.c.l.b16 %v50
    %v108 = vunpack.c.l.b16 %v51
    %v109 = vunpack.c.l.b16 %v52
    %v110 = vunpack.c.l.b16 %v53
    %v111 = vunpack.c.l.b16 %v54
    %v112 = vunpack.c.l.b16 %v55
    %v113 = vunpack.c.l.b16 %v56
    %v114 = vunpack.c.l.b16 %v57
    %v115 = vunpack.c.l.b16 %v58
    %v116 = vunpack.c.l.b16 %v59
    %v117 = vunpack.c.l.b16 %v60
    %v118 = vunpack.c.l.b16 %v61
    %v119 = vunpack.c.l.b16 %v62
    %v120 = vunpack.c.l.b16 %v63
    %v121 = vpack.c.b16 %v106, %v105
    %v122 = vpack.c.b16 %v108, %v107
    %v123 = vpack.c.b16 %v110, %v109
    %v124 = vpack.c.b16 %v112, %v111
    %v125 = vpack.c.b16 %v114, %v113
    %v126 = vpack.c.b16 %v116, %v115
    %v127 = vpack.c.b16 %v118, %v117
    %v128 = vpack.c.b16 %v120, %v119
    %v137 = vunpack.c.l.b16 %v64
    %v138 = vunpack.c.h.b16 %v64
    %v139 = vunpack.c.l.b16 %v65
    %v140 = vunpack.c.l.b16 %v66
    %v141 = vunpack.c.h.b16 %v66
    %v142 = vunpack.c.l.b16 %v67
    %v143 = vunpack.c.l.b16 %v68
    %v144 = vunpack.c.h.b16 %v68
    %v145 = vunpack.c.l.b16 %v69
    %v146 = vunpack.c.l.b16 %v70
    %v147 = vunpack.c.h.b16 %v70
    %v148 = vunpack.c.l.b16 %v71
    %v149 = vpack.c.b16 %v140, %v137
    %v150 = vpack.c.b16 %v141, %v138
    %v151 = vpack.c.b16 %v142, %v139
    %v152 = vpack.c.b16 %v146, %v143
    %v153 = vpack.c.b16 %v147, %v144
    %v154 = vpack.c.b16 %v148, %v145
    %vm161 = vcmask 261120
    %v163 = vsel %vm161, %v121, 0
    %v166 = vsel %vm161, %v122, 0
    %v169 = vsel %vm161, %v123, 0
    %v172 = vsel %vm161, %v124, 0
    %v175 = vsel %vm161, %v125, 0
    %v178 = vsel %vm161, %v126, 0
    %v181 = vsel %vm161, %v127, 0
    %v184 = vsel %vm161, %v128, 0
    %186 = vmatprep.subr.bf16.mxu0 0
    %187 = vmatpush1.bf16.msra.mxu0 0
    %188 = vmatprep.subr.bf16.mxu0 0
    %189 = vmatpush1.bf16.msra.mxu0 0
    %190 = vmatprep.subr.bf16.mxu0 0
    %191 = vmatpush1.bf16.msra.mxu0 0
    %192 = vmatprep.subr.bf16.mxu0 0
    %193 = vmatpush1.bf16.msra.mxu0 0
    %194 = vmatprep.subr.bf16.mxu0 0
    %195 = vmatpush1.bf16.msra.mxu0 0
    %196 = vmatprep.subr.bf16.mxu0 0
    %197 = vmatpush1.bf16.msra.mxu0 0
    %198 = vmatprep.subr.bf16.mxu0 %v153
    %199 = vmatpush1.bf16.msra.mxu0 %v152
    %200 = vmatprep.subr.bf16.mxu0 %v150
    %201 = vmatpush1.bf16.msra.mxu0 %v149
    %202 = vmatprep.subr.bf16.mxu0 0
    %203 = vmatpush2.bf16.msra.mxu0 0
    %204 = vmatprep.subr.bf16.mxu0 0
    %205 = vmatpush2.bf16.msra.mxu0 0
    %206 = vmatprep.subr.bf16.mxu0 0
    %207 = vmatpush2.bf16.msra.mxu0 0
    %208 = vmatprep.subr.bf16.mxu0 0
    %209 = vmatpush2.bf16.msra.mxu0 0
    %210 = vmatprep.subr.bf16.mxu0 0
    %211 = vmatpush2.bf16.msra.mxu0 0
    %212 = vmatprep.subr.bf16.mxu0 0
    %213 = vmatpush2.bf16.msra.mxu0 0
    %214 = vmatprep.subr.bf16.mxu0 0
    %215 = vmatpush2.bf16.msra.mxu0 0
    %216 = vmatprep.subr.bf16.mxu0 0
    %217 = vmatpush2.bf16.msra.mxu0 0
    %218 = vmatprep.mubr.bf16.mxu0 0
    %219 = vmatmul.mubr.bf16.gmra.mxu0 %v163
    %v220 = vpop.f32.mrf.mxu0
    %v221 = vadd.f32 %v77, %v220
    %v222 = vpop.f32.mrf.mxu0
    %v223 = vadd.f32 %v81, %v222
    %v224 = vpop.f32.mrf.mxu0
    %v225 = vadd.f32 %v77, %v224
    %v226 = vpop.f32.mrf.mxu0
    %v227 = vadd.f32 %v81, %v226
    %228 = vmatprep.mubr.bf16.mxu0 0
    %229 = vmatmul.mubr.bf16.gmra.mxu0 %v166
    %v230 = vpop.f32.mrf.mxu0
    %v231 = vadd.f32 %v77, %v230
    %v232 = vpop.f32.mrf.mxu0
    %v233 = vadd.f32 %v81, %v232
    %v234 = vpop.f32.mrf.mxu0
    %v235 = vadd.f32 %v77, %v234
    %v236 = vpop.f32.mrf.mxu0
    %v237 = vadd.f32 %v81, %v236
    %238 = vmatprep.mubr.bf16.mxu0 0
    %239 = vmatmul.mubr.bf16.gmra.mxu0 %v169
    %v240 = vpop.f32.mrf.mxu0
    %v241 = vadd.f32 %v77, %v240
    %v242 = vpop.f32.mrf.mxu0
    %v243 = vadd.f32 %v81, %v242
    %v244 = vpop.f32.mrf.mxu0
    %v245 = vadd.f32 %v77, %v244
    %v246 = vpop.f32.mrf.mxu0
    %v247 = vadd.f32 %v81, %v246
    %248 = vmatprep.mubr.bf16.mxu0 0
    %249 = vmatmul.mubr.bf16.gmra.mxu0 %v172
    %v250 = vpop.f32.mrf.mxu0
    %v251 = vadd.f32 %v77, %v250
    %v252 = vpop.f32.mrf.mxu0
    %v253 = vadd.f32 %v81, %v252
    %v254 = vpop.f32.mrf.mxu0
    %v255 = vadd.f32 %v77, %v254
    %v256 = vpop.f32.mrf.mxu0
    %v257 = vadd.f32 %v81, %v256
    %258 = vmatprep.mubr.bf16.mxu0 0
    %259 = vmatmul.mubr.bf16.gmra.mxu0 %v175
    %v260 = vpop.f32.mrf.mxu0
    %v261 = vadd.f32 %v77, %v260
    %v262 = vpop.f32.mrf.mxu0
    %v263 = vadd.f32 %v81, %v262
    %v264 = vpop.f32.mrf.mxu0
    %v265 = vadd.f32 %v77, %v264
    %v266 = vpop.f32.mrf.mxu0
    %v267 = vadd.f32 %v81, %v266
    %268 = vmatprep.mubr.bf16.mxu0 0
    %269 = vmatmul.mubr.bf16.gmra.mxu0 %v178
    %v270 = vpop.f32.mrf.mxu0
    %v271 = vadd.f32 %v77, %v270
    %v272 = vpop.f32.mrf.mxu0
    %v273 = vadd.f32 %v81, %v272
    %v274 = vpop.f32.mrf.mxu0
    %v275 = vadd.f32 %v77, %v274
    %v276 = vpop.f32.mrf.mxu0
    %v277 = vadd.f32 %v81, %v276
    %278 = vmatprep.mubr.bf16.mxu0 0
    %279 = vmatmul.mubr.bf16.gmra.mxu0 %v181
    %v280 = vpop.f32.mrf.mxu0
    %v281 = vadd.f32 %v77, %v280
    %v282 = vpop.f32.mrf.mxu0
    %v283 = vadd.f32 %v81, %v282
    %v284 = vpop.f32.mrf.mxu0
    %v285 = vadd.f32 %v77, %v284
    %v286 = vpop.f32.mrf.mxu0
    %v287 = vadd.f32 %v81, %v286
    %288 = vmatprep.mubr.bf16.mxu0 0
    %289 = vmatmul.mubr.bf16.gmra.mxu0 %v184
    %v290 = vpop.f32.mrf.mxu0
    %v291 = vadd.f32 %v77, %v290
    %v292 = vpop.f32.mrf.mxu0
    %v293 = vadd.f32 %v81, %v292
    %v294 = vpop.f32.mrf.mxu0
    %v295 = vadd.f32 %v77, %v294
    %v296 = vpop.f32.mrf.mxu0
    %v297 = vadd.f32 %v81, %v296
    %298 = vdwg.mxu0
    %299 = vmatprep.subr.bf16.mxu0 0
    %300 = vmatpush1.bf16.msra.mxu0 0
    %301 = vmatprep.subr.bf16.mxu0 0
    %302 = vmatpush1.bf16.msra.mxu0 0
    %303 = vmatprep.subr.bf16.mxu0 0
    %304 = vmatpush1.bf16.msra.mxu0 0
    %305 = vmatprep.subr.bf16.mxu0 0
    %306 = vmatpush1.bf16.msra.mxu0 0
    %307 = vmatprep.subr.bf16.mxu0 0
    %308 = vmatpush1.bf16.msra.mxu0 0
    %309 = vmatprep.subr.bf16.mxu0 0
    %310 = vmatpush1.bf16.msra.mxu0 0
    %311 = vmatprep.subr.bf16.mxu0 0
    %312 = vmatpush1.bf16.msra.mxu0 %v154
    %313 = vmatprep.subr.bf16.mxu0 0
    %314 = vmatpush1.bf16.msra.mxu0 %v151
    %315 = vmatprep.subr.bf16.mxu0 0
    %316 = vmatpush2.bf16.msra.mxu0 0
    %317 = vmatprep.subr.bf16.mxu0 0
    %318 = vmatpush2.bf16.msra.mxu0 0
    %319 = vmatprep.subr.bf16.mxu0 0
    %320 = vmatpush2.bf16.msra.mxu0 0
    %321 = vmatprep.subr.bf16.mxu0 0
    %322 = vmatpush2.bf16.msra.mxu0 0
    %323 = vmatprep.subr.bf16.mxu0 0
    %324 = vmatpush2.bf16.msra.mxu0 0
    %325 = vmatprep.subr.bf16.mxu0 0
    %326 = vmatpush2.bf16.msra.mxu0 0
    %327 = vmatprep.subr.bf16.mxu0 0
    %328 = vmatpush2.bf16.msra.mxu0 0
    %329 = vmatprep.subr.bf16.mxu0 0
    %330 = vmatpush2.bf16.msra.mxu0 0
    %331 = vmatprep.mubr.bf16.mxu0 0
    %332 = vmatmul.mubr.bf16.gmra.mxu0 %v163
    %v333 = vpop.f32.mrf.mxu0
    %v334 = vadd.f32 %v85, %v333
    %v335 = vpop.f32.mrf.mxu0
    %v336 = vpop.f32.mrf.mxu0
    %v337 = vadd.f32 %v85, %v336
    %v338 = vpop.f32.mrf.mxu0
    %339 = vmatprep.mubr.bf16.mxu0 0
    %340 = vmatmul.mubr.bf16.gmra.mxu0 %v166
    %v341 = vpop.f32.mrf.mxu0
    %v342 = vadd.f32 %v85, %v341
    %v343 = vpop.f32.mrf.mxu0
    %v344 = vpop.f32.mrf.mxu0
    %v345 = vadd.f32 %v85, %v344
    %v346 = vpop.f32.mrf.mxu0
    %347 = vmatprep.mubr.bf16.mxu0 0
    %348 = vmatmul.mubr.bf16.gmra.mxu0 %v169
    %v349 = vpop.f32.mrf.mxu0
    %v350 = vadd.f32 %v85, %v349
    %v351 = vpop.f32.mrf.mxu0
    %v352 = vpop.f32.mrf.mxu0
    %v353 = vadd.f32 %v85, %v352
    %v354 = vpop.f32.mrf.mxu0
    %355 = vmatprep.mubr.bf16.mxu0 0
    %356 = vmatmul.mubr.bf16.gmra.mxu0 %v172
    %v357 = vpop.f32.mrf.mxu0
    %v358 = vadd.f32 %v85, %v357
    %v359 = vpop.f32.mrf.mxu0
    %v360 = vpop.f32.mrf.mxu0
    %v361 = vadd.f32 %v85, %v360
    %v362 = vpop.f32.mrf.mxu0
    %363 = vmatprep.mubr.bf16.mxu0 0
    %364 = vmatmul.mubr.bf16.gmra.mxu0 %v175
    %v365 = vpop.f32.mrf.mxu0
    %v366 = vadd.f32 %v85, %v365
    %v367 = vpop.f32.mrf.mxu0
    %v368 = vpop.f32.mrf.mxu0
    %v369 = vadd.f32 %v85, %v368
    %v370 = vpop.f32.mrf.mxu0
    %371 = vmatprep.mubr.bf16.mxu0 0
    %372 = vmatmul.mubr.bf16.gmra.mxu0 %v178
    %v373 = vpop.f32.mrf.mxu0
    %v374 = vadd.f32 %v85, %v373
    %v375 = vpop.f32.mrf.mxu0
    %v376 = vpop.f32.mrf.mxu0
    %v377 = vadd.f32 %v85, %v376
    %v378 = vpop.f32.mrf.mxu0
    %379 = vmatprep.mubr.bf16.mxu0 0
    %380 = vmatmul.mubr.bf16.gmra.mxu0 %v181
    %v381 = vpop.f32.mrf.mxu0
    %v382 = vadd.f32 %v85, %v381
    %v383 = vpop.f32.mrf.mxu0
    %v384 = vpop.f32.mrf.mxu0
    %v385 = vadd.f32 %v85, %v384
    %v386 = vpop.f32.mrf.mxu0
    %387 = vmatprep.mubr.bf16.mxu0 0
    %388 = vmatmul.mubr.bf16.gmra.mxu0 %v184
    %v389 = vpop.f32.mrf.mxu0
    %v390 = vadd.f32 %v85, %v389
    %v391 = vpop.f32.mrf.mxu0
    %v392 = vpop.f32.mrf.mxu0
    %v393 = vadd.f32 %v85, %v392
    %v394 = vpop.f32.mrf.mxu0
    %395 = vdwg.mxu0
    %396 = vst [vmem:[#allocation2] sm:$0xff] %v221
    %397 = vst [vmem:[#allocation2 + $0x8] sm:$0xff] %v223
    %398 = vst [vmem:[#allocation2 + $0x10] sm:$0xff] %v334
    %399 = vst [vmem:[#allocation2 + $0x18] sm:$0xff] %v225
    %400 = vst [vmem:[#allocation2 + $0x20] sm:$0xff] %v227
    %401 = vst [vmem:[#allocation2 + $0x28] sm:$0xff] %v337
    %402 = vst [vmem:[#allocation2 + $0x30] sm:$0xff] %v231
    %403 = vst [vmem:[#allocation2 + $0x38] sm:$0xff] %v233
    %404 = vst [vmem:[#allocation2 + $0x40] sm:$0xff] %v342
    %405 = vst [vmem:[#allocation2 + $0x48] sm:$0xff] %v235
    %406 = vst [vmem:[#allocation2 + $0x50] sm:$0xff] %v237
    %407 = vst [vmem:[#allocation2 + $0x58] sm:$0xff] %v345
    %408 = vst [vmem:[#allocation2 + $0x60] sm:$0xff] %v241
    %409 = vst [vmem:[#allocation2 + $0x68] sm:$0xff] %v243
    %410 = vst [vmem:[#allocation2 + $0x70] sm:$0xff] %v350
    %411 = vst [vmem:[#allocation2 + $0x78] sm:$0xff] %v245
    %412 = vst [vmem:[#allocation2 + $0x80] sm:$0xff] %v247
    %413 = vst [vmem:[#allocation2 + $0x88] sm:$0xff] %v353
    %414 = vst [vmem:[#allocation2 + $0x90] sm:$0xff] %v251
    %415 = vst [vmem:[#allocation2 + $0x98] sm:$0xff] %v253
    %416 = vst [vmem:[#allocation2 + $0xa0] sm:$0xff] %v358
    %417 = vst [vmem:[#allocation2 + $0xa8] sm:$0xff] %v255
    %418 = vst [vmem:[#allocation2 + $0xb0] sm:$0xff] %v257
    %419 = vst [vmem:[#allocation2 + $0xb8] sm:$0xff] %v361
    %420 = vst [vmem:[#allocation2 + $0xc0] sm:$0xff] %v261
    %421 = vst [vmem:[#allocation2 + $0xc8] sm:$0xff] %v263
    %422 = vst [vmem:[#allocation2 + $0xd0] sm:$0xff] %v366
    %423 = vst [vmem:[#allocation2 + $0xd8] sm:$0xff] %v265
    %424 = vst [vmem:[#allocation2 + $0xe0] sm:$0xff] %v267
    %425 = vst [vmem:[#allocation2 + $0xe8] sm:$0xff] %v369
    %426 = vst [vmem:[#allocation2 + $0xf0] sm:$0xff] %v271
    %427 = vst [vmem:[#allocation2 + $0xf8] sm:$0xff] %v273
    %428 = vst [vmem:[#allocation2 + $0x100] sm:$0xff] %v374
    %429 = vst [vmem:[#allocation2 + $0x108] sm:$0xff] %v275
    %430 = vst [vmem:[#allocation2 + $0x110] sm:$0xff] %v277
    %431 = vst [vmem:[#allocation2 + $0x118] sm:$0xff] %v377
    %432 = vst [vmem:[#allocation2 + $0x120] sm:$0xff] %v281
    %433 = vst [vmem:[#allocation2 + $0x128] sm:$0xff] %v283
    %434 = vst [vmem:[#allocation2 + $0x130] sm:$0xff] %v382
    %435 = vst [vmem:[#allocation2 + $0x138] sm:$0xff] %v285
    %436 = vst [vmem:[#allocation2 + $0x140] sm:$0xff] %v287
    %437 = vst [vmem:[#allocation2 + $0x148] sm:$0xff] %v385
    %438 = vst [vmem:[#allocation2 + $0x150] sm:$0xff] %v291
    %439 = vst [vmem:[#allocation2 + $0x158] sm:$0xff] %v293
    %440 = vst [vmem:[#allocation2 + $0x160] sm:$0xff] %v390
    %441 = vst [vmem:[#allocation2 + $0x168] sm:$0xff] %v295
    %442 = vst [vmem:[#allocation2 + $0x170] sm:$0xff] %v297
    %443 = vst [vmem:[#allocation2 + $0x178] sm:$0xff] %v393
    %v444 = vld [vmem:[%s5] sm:$0x7]
    %s445 = smul.u32 0, 3
    %s446 = smul.addr %s445, 8
    %s447 = scalar_lea.vmem [#allocation2], %s446
    %v448 = vld [vmem:[%s447] sm:$0xff]
    %v449 = vld [vmem:[%s447 + $0x8] sm:$0xff]
    %v450 = vld [vmem:[%s447 + $0x10] sm:$0xff]
    %v451 = vld [vmem:[%s447 + $0x18] sm:$0xff]
    %v452 = vld [vmem:[%s447 + $0x20] sm:$0xff]
    %v453 = vld [vmem:[%s447 + $0x28] sm:$0xff]
    %v454 = vld [vmem:[%s3] sm:$0xff]
    %v455 = vld [vmem:[%s3 + $0x8] sm:$0xf]
    %v456 = vld [vmem:[%s3 + $0xc] sm:$0xff]
    %v457 = vld [vmem:[%s3 + $0x14] sm:$0xf]
    %v458 = vld [vmem:[%s3 + $0x18] sm:$0xff]
    %v459 = vld [vmem:[%s3 + $0x20] sm:$0xf]
    %v460 = vld [vmem:[%s3 + $0x24] sm:$0xff]
    %v461 = vld [vmem:[%s3 + $0x2c] sm:$0xf]
    %v462 = vld [vmem:[%s3 + $0x30] sm:$0xff]
    %v463 = vld [vmem:[%s3 + $0x38] sm:$0xf]
    %v464 = vld [vmem:[%s3 + $0x3c] sm:$0xff]
    %v465 = vld [vmem:[%s3 + $0x44] sm:$0xf]
    %v466 = vld [vmem:[%s3 + $0x48] sm:$0xff]
    %v467 = vld [vmem:[%s3 + $0x50] sm:$0xf]
    %v468 = vld [vmem:[%s3 + $0x54] sm:$0xff]
    %v469 = vld [vmem:[%s3 + $0x5c] sm:$0xf]
    %v470 = vld [vmem:[%s3 + $0x60] sm:$0xff]
    %v471 = vld [vmem:[%s3 + $0x68] sm:$0xf]
    %v472 = vld [vmem:[%s3 + $0x6c] sm:$0xff]
    %v473 = vld [vmem:[%s3 + $0x74] sm:$0xf]
    %v474 = vld [vmem:[%s3 + $0x78] sm:$0xff]
    %v475 = vld [vmem:[%s3 + $0x80] sm:$0xf]
    %v476 = vld [vmem:[%s3 + $0x84] sm:$0xff]
    %v477 = vld [vmem:[%s3 + $0x8c] sm:$0xf]
    %v478 = vld [vmem:[%s3 + $0x90] sm:$0xff]
    %v479 = vld [vmem:[%s3 + $0x98] sm:$0xf]
    %v480 = vld [vmem:[%s3 + $0x9c] sm:$0xff]
    %v481 = vld [vmem:[%s3 + $0xa4] sm:$0xf]
    %v482 = vld [vmem:[%s3 + $0xa8] sm:$0xff]
    %v483 = vld [vmem:[%s3 + $0xb0] sm:$0xf]
    %v484 = vld [vmem:[%s3 + $0xb4] sm:$0xff]
    %v485 = vld [vmem:[%s3 + $0xbc] sm:$0xf]
    %v487 = vlaneseq
    %v488 = vshrl.u32 %v487, 7
    %v489 = vsub.s32 0, %v488
    %v490 = vrot.slane %v444, %v489
    %v491 = vlaneseq
    %v492 = vshrl.u32 %v491, 7
    %v493 = vsub.s32 1, %v492
    %v494 = vrot.slane %v444, %v493
    %v495 = vlaneseq
    %v496 = vshrl.u32 %v495, 7
    %v497 = vsub.s32 2, %v496
    %v498 = vrot.slane %v444, %v497
    %v534 = vunpack.c.l.b16 %v454
    %v535 = vunpack.c.h.b16 %v454
    %v536 = vunpack.c.l.b16 %v455
    %v537 = vunpack.c.l.b16 %v456
    %v538 = vunpack.c.h.b16 %v456
    %v539 = vunpack.c.l.b16 %v457
    %v540 = vunpack.c.l.b16 %v458
    %v541 = vunpack.c.h.b16 %v458
    %v542 = vunpack.c.l.b16 %v459
    %v543 = vunpack.c.l.b16 %v460
    %v544 = vunpack.c.h.b16 %v460
    %v545 = vunpack.c.l.b16 %v461
    %v546 = vunpack.c.l.b16 %v462
    %v547 = vunpack.c.h.b16 %v462
    %v548 = vunpack.c.l.b16 %v463
    %v549 = vunpack.c.l.b16 %v464
    %v550 = vunpack.c.h.b16 %v464
    %v551 = vunpack.c.l.b16 %v465
    %v552 = vunpack.c.l.b16 %v466
    %v553 = vunpack.c.h.b16 %v466
    %v554 = vunpack.c.l.b16 %v467
    %v555 = vunpack.c.l.b16 %v468
    %v556 = vunpack.c.h.b16 %v468
    %v557 = vunpack.c.l.b16 %v469
    %v558 = vunpack.c.l.b16 %v470
    %v559 = vunpack.c.h.b16 %v470
    %v560 = vunpack.c.l.b16 %v471
    %v561 = vunpack.c.l.b16 %v472
    %v562 = vunpack.c.h.b16 %v472
    %v563 = vunpack.c.l.b16 %v473
    %v564 = vunpack.c.l.b16 %v474
    %v565 = vunpack.c.h.b16 %v474
    %v566 = vunpack.c.l.b16 %v475
    %v567 = vunpack.c.l.b16 %v476
    %v568 = vunpack.c.h.b16 %v476
    %v569 = vunpack.c.l.b16 %v477
    %v570 = vunpack.c.l.b16 %v478
    %v571 = vunpack.c.h.b16 %v478
    %v572 = vunpack.c.l.b16 %v479
    %v573 = vunpack.c.l.b16 %v480
    %v574 = vunpack.c.h.b16 %v480
    %v575 = vunpack.c.l.b16 %v481
    %v576 = vunpack.c.l.b16 %v482
    %v577 = vunpack.c.h.b16 %v482
    %v578 = vunpack.c.l.b16 %v483
    %v579 = vunpack.c.l.b16 %v484
    %v580 = vunpack.c.h.b16 %v484
    %v581 = vunpack.c.l.b16 %v485
    %v582 = vpack.c.b16 %v537, %v534
    %v583 = vpack.c.b16 %v538, %v535
    %v584 = vpack.c.b16 %v539, %v536
    %v585 = vpack.c.b16 %v543, %v540
    %v586 = vpack.c.b16 %v544, %v541
    %v587 = vpack.c.b16 %v545, %v542
    %v588 = vpack.c.b16 %v549, %v546
    %v589 = vpack.c.b16 %v550, %v547
    %v590 = vpack.c.b16 %v551, %v548
    %v591 = vpack.c.b16 %v555, %v552
    %v592 = vpack.c.b16 %v556, %v553
    %v593 = vpack.c.b16 %v557, %v554
    %v594 = vpack.c.b16 %v561, %v558
    %v595 = vpack.c.b16 %v562, %v559
    %v596 = vpack.c.b16 %v563, %v560
    %v597 = vpack.c.b16 %v567, %v564
    %v598 = vpack.c.b16 %v568, %v565
    %v599 = vpack.c.b16 %v569, %v566
    %v600 = vpack.c.b16 %v573, %v570
    %v601 = vpack.c.b16 %v574, %v571
    %v602 = vpack.c.b16 %v575, %v572
    %v603 = vpack.c.b16 %v579, %v576
    %v604 = vpack.c.b16 %v580, %v577
    %v605 = vpack.c.b16 %v581, %v578
    %630 = vmatprep.subr.bf16.mxu0 %v604
    %631 = vmatpush1.bf16.msra.mxu0 %v603
    %632 = vmatprep.subr.bf16.mxu0 %v601
    %633 = vmatpush1.bf16.msra.mxu0 %v600
    %634 = vmatprep.subr.bf16.mxu0 %v598
    %635 = vmatpush1.bf16.msra.mxu0 %v597
    %636 = vmatprep.subr.bf16.mxu0 %v595
    %637 = vmatpush1.bf16.msra.mxu0 %v594
    %638 = vmatprep.subr.bf16.mxu0 %v592
    %639 = vmatpush1.bf16.msra.mxu0 %v591
    %640 = vmatprep.subr.bf16.mxu0 %v589
    %641 = vmatpush1.bf16.msra.mxu0 %v588
    %642 = vmatprep.subr.bf16.mxu0 %v586
    %643 = vmatpush1.bf16.msra.mxu0 %v585
    %644 = vmatprep.subr.bf16.mxu0 %v583
    %645 = vmatpush1.bf16.msra.mxu0 %v582
    %646 = vmatprep.subr.bf16.mxu0 0
    %647 = vmatpush2.bf16.msra.mxu0 0
    %648 = vmatprep.subr.bf16.mxu0 0
    %649 = vmatpush2.bf16.msra.mxu0 0
    %650 = vmatprep.subr.bf16.mxu0 0
    %651 = vmatpush2.bf16.msra.mxu0 0
    %652 = vmatprep.subr.bf16.mxu0 0
    %653 = vmatpush2.bf16.msra.mxu0 0
    %654 = vmatprep.subr.bf16.mxu0 0
    %655 = vmatpush2.bf16.msra.mxu0 0
    %656 = vmatprep.subr.bf16.mxu0 0
    %657 = vmatpush2.bf16.msra.mxu0 0
    %658 = vmatprep.subr.bf16.mxu0 0
    %659 = vmatpush2.bf16.msra.mxu0 0
    %660 = vmatprep.subr.bf16.mxu0 0
    %661 = vmatpush2.bf16.msra.mxu0 0
    %662 = vmatprep.mubr.bf16.mxu0 0
    %663 = vmatmul.mubr.bf16.gmra.mxu0 0
    %v664 = vpop.f32.mrf.mxu0
    %v665 = vadd.f32 %v490, %v664
    %v666 = vpop.f32.mrf.mxu0
    %v667 = vadd.f32 %v494, %v666
    %v668 = vpop.f32.mrf.mxu0
    %v669 = vadd.f32 %v490, %v668
    %v670 = vpop.f32.mrf.mxu0
    %v671 = vadd.f32 %v494, %v670
    %672 = vdwg.mxu0
    %673 = vmatprep.subr.bf16.mxu0 0
    %674 = vmatpush1.bf16.msra.mxu0 %v605
    %675 = vmatprep.subr.bf16.mxu0 0
    %676 = vmatpush1.bf16.msra.mxu0 %v602
    %677 = vmatprep.subr.bf16.mxu0 0
    %678 = vmatpush1.bf16.msra.mxu0 %v599
    %679 = vmatprep.subr.bf16.mxu0 0
    %680 = vmatpush1.bf16.msra.mxu0 %v596
    %681 = vmatprep.subr.bf16.mxu0 0
    %682 = vmatpush1.bf16.msra.mxu0 %v593
    %683 = vmatprep.subr.bf16.mxu0 0
    %684 = vmatpush1.bf16.msra.mxu0 %v590
    %685 = vmatprep.subr.bf16.mxu0 0
    %686 = vmatpush1.bf16.msra.mxu0 %v587
    %687 = vmatprep.subr.bf16.mxu0 0
    %688 = vmatpush1.bf16.msra.mxu0 %v584
    %689 = vmatprep.subr.bf16.mxu0 0
    %690 = vmatpush2.bf16.msra.mxu0 0
    %691 = vmatprep.subr.bf16.mxu0 0
    %692 = vmatpush2.bf16.msra.mxu0 0
    %693 = vmatprep.subr.bf16.mxu0 0
    %694 = vmatpush2.bf16.msra.mxu0 0
    %695 = vmatprep.subr.bf16.mxu0 0
    %696 = vmatpush2.bf16.msra.mxu0 0
    %697 = vmatprep.subr.bf16.mxu0 0
    %698 = vmatpush2.bf16.msra.mxu0 0
    %699 = vmatprep.subr.bf16.mxu0 0
    %700 = vmatpush2.bf16.msra.mxu0 0
    %701 = vmatprep.subr.bf16.mxu0 0
    %702 = vmatpush2.bf16.msra.mxu0 0
    %703 = vmatprep.subr.bf16.mxu0 0
    %704 = vmatpush2.bf16.msra.mxu0 0
    %705 = vmatprep.mubr.bf16.mxu0 0
    %706 = vmatmul.mubr.bf16.gmra.mxu0 0
    %v707 = vpop.f32.mrf.mxu0
    %v708 = vadd.f32 %v498, %v707
    %v709 = vpop.f32.mrf.mxu0
    %v710 = vpop.f32.mrf.mxu0
    %v711 = vadd.f32 %v498, %v710
    %v712 = vpop.f32.mrf.mxu0
    %713 = vdwg.mxu0
    %v714 = vadd.f32 %v448, %v665
    %v715 = vadd.f32 %v451, %v669
    %v716 = vxor.u32 %v714, 2147483648
    %v717 = vxor.u32 %v715, 2147483648
    %v718 = vmul.f32 %v716, 1.442695
    %v719 = vpow.pop %v718
    %v720 = vmul.f32 %v717, 1.442695
    %v721 = vpow.pop %v720
    %v722 = vadd.f32 %v719, 1.0
    %v723 = vadd.f32 %v721, 1.0
    %v724 = vrcp.pop %v722
    %v725 = vmul.f32 1.0, %v724
    %v726 = vrcp.pop %v723
    %v727 = vmul.f32 1.0, %v726
    %v728 = vadd.f32 %v449, %v667
    %v729 = vadd.f32 %v452, %v671
    %v730 = vxor.u32 %v728, 2147483648
    %v731 = vxor.u32 %v729, 2147483648
    %v732 = vmul.f32 %v730, 1.442695
    %v733 = vpow.pop %v732
    %v734 = vmul.f32 %v731, 1.442695
    %v735 = vpow.pop %v734
    %v736 = vadd.f32 %v733, 1.0
    %v737 = vadd.f32 %v735, 1.0
    %v738 = vrcp.pop %v736
    %v739 = vmul.f32 1.0, %v738
    %v740 = vrcp.pop %v737
    %v741 = vmul.f32 1.0, %v740
    %v742 = vmul.f32 %v725, %v708
    %v743 = vmul.f32 %v727, %v711
    %v744 = vadd.f32 %v450, %v742
    %v745 = vadd.f32 %v453, %v743
    %v746 = vtanh.pop %v744
    %v747 = vtanh.pop %v745
    %v748 = vsub.f32 1.0, %v739
    %v749 = vsub.f32 1.0, %v741
    %v750 = vmul.f32 %v748, %v746
    %v751 = vmul.f32 %v749, %v747
    %v752 = vmul.f32 %v739, 0.0
    %v753 = vmul.f32 %v741, 0.0
    %v754 = vadd.f32 %v750, %v752
    %v755 = vadd.f32 %v751, %v753
    %v756 = vld [vmem:[%s1] sm:$0xff]
    %v757 = vld [vmem:[%s1 + $0x8] sm:$0xff]
    %759 = vset.pattern.permute.xlu0 0
    %760 = vperm.xlu0 %759, %v756
    %v761 = vpop.permute.xlu0 %760
    %764 = vset.pattern.permute.xlu0 0
    %765 = vperm.xlu0 %764, %v757
    %v766 = vpop.permute.xlu0 %765
    %v768 = vmul.f32 %v761, %v754
    %v769 = vmul.f32 %v766, %v755
    %v770 = vadd.f32 %v768, 0.0
    %v771 = vadd.f32 %v769, 0.0
    %s772 = smul.u32 2, 3
    %s773 = smul.addr %s772, 8
    %s774 = scalar_lea.vmem [#allocation2], %s773
    %v775 = vld [vmem:[%s774] sm:$0xff]
    %v776 = vld [vmem:[%s774 + $0x8] sm:$0xff]
    %v777 = vld [vmem:[%s774 + $0x10] sm:$0xff]
    %v778 = vld [vmem:[%s774 + $0x18] sm:$0xff]
    %v779 = vld [vmem:[%s774 + $0x20] sm:$0xff]
    %v780 = vld [vmem:[%s774 + $0x28] sm:$0xff]
    %v781 = vpack.c.bf16 %v771, %v770
    %782 = vmatprep.subr.bf16.mxu0 %v604
    %783 = vmatpush1.bf16.msra.mxu0 %v603
    %784 = vmatprep.subr.bf16.mxu0 %v601
    %785 = vmatpush1.bf16.msra.mxu0 %v600
    %786 = vmatprep.subr.bf16.mxu0 %v598
    %787 = vmatpush1.bf16.msra.mxu0 %v597
    %788 = vmatprep.subr.bf16.mxu0 %v595
    %789 = vmatpush1.bf16.msra.mxu0 %v594
    %790 = vmatprep.subr.bf16.mxu0 %v592
    %791 = vmatpush1.bf16.msra.mxu0 %v591
    %792 = vmatprep.subr.bf16.mxu0 %v589
    %793 = vmatpush1.bf16.msra.mxu0 %v588
    %794 = vmatprep.subr.bf16.mxu0 %v586
    %795 = vmatpush1.bf16.msra.mxu0 %v585
    %796 = vmatprep.subr.bf16.mxu0 %v583
    %797 = vmatpush1.bf16.msra.mxu0 %v582
    %798 = vmatprep.subr.bf16.mxu0 0
    %799 = vmatpush2.bf16.msra.mxu0 0
    %800 = vmatprep.subr.bf16.mxu0 0
    %801 = vmatpush2.bf16.msra.mxu0 0
    %802 = vmatprep.subr.bf16.mxu0 0
    %803 = vmatpush2.bf16.msra.mxu0 0
    %804 = vmatprep.subr.bf16.mxu0 0
    %805 = vmatpush2.bf16.msra.mxu0 0
    %806 = vmatprep.subr.bf16.mxu0 0
    %807 = vmatpush2.bf16.msra.mxu0 0
    %808 = vmatprep.subr.bf16.mxu0 0
    %809 = vmatpush2.bf16.msra.mxu0 0
    %810 = vmatprep.subr.bf16.mxu0 0
    %811 = vmatpush2.bf16.msra.mxu0 0
    %812 = vmatprep.subr.bf16.mxu0 0
    %813 = vmatpush2.bf16.msra.mxu0 0
    %814 = vmatprep.mubr.bf16.mxu0 0
    %815 = vmatmul.mubr.bf16.gmra.mxu0 %v781
    %v816 = vpop.f32.mrf.mxu0
    %v817 = vadd.f32 %v490, %v816
    %v818 = vpop.f32.mrf.mxu0
    %v819 = vadd.f32 %v494, %v818
    %v820 = vpop.f32.mrf.mxu0
    %v821 = vadd.f32 %v490, %v820
    %v822 = vpop.f32.mrf.mxu0
    %v823 = vadd.f32 %v494, %v822
    %824 = vdwg.mxu0
    %825 = vmatprep.subr.bf16.mxu0 0
    %826 = vmatpush1.bf16.msra.mxu0 %v605
    %827 = vmatprep.subr.bf16.mxu0 0
    %828 = vmatpush1.bf16.msra.mxu0 %v602
    %829 = vmatprep.subr.bf16.mxu0 0
    %830 = vmatpush1.bf16.msra.mxu0 %v599
    %831 = vmatprep.subr.bf16.mxu0 0
    %832 = vmatpush1.bf16.msra.mxu0 %v596
    %833 = vmatprep.subr.bf16.mxu0 0
    %834 = vmatpush1.bf16.msra.mxu0 %v593
    %835 = vmatprep.subr.bf16.mxu0 0
    %836 = vmatpush1.bf16.msra.mxu0 %v590
    %837 = vmatprep.subr.bf16.mxu0 0
    %838 = vmatpush1.bf16.msra.mxu0 %v587
    %839 = vmatprep.subr.bf16.mxu0 0
    %840 = vmatpush1.bf16.msra.mxu0 %v584
    %841 = vmatprep.subr.bf16.mxu0 0
    %842 = vmatpush2.bf16.msra.mxu0 0
    %843 = vmatprep.subr.bf16.mxu0 0
    %844 = vmatpush2.bf16.msra.mxu0 0
    %845 = vmatprep.subr.bf16.mxu0 0
    %846 = vmatpush2.bf16.msra.mxu0 0
    %847 = vmatprep.subr.bf16.mxu0 0
    %848 = vmatpush2.bf16.msra.mxu0 0
    %849 = vmatprep.subr.bf16.mxu0 0
    %850 = vmatpush2.bf16.msra.mxu0 0
    %851 = vmatprep.subr.bf16.mxu0 0
    %852 = vmatpush2.bf16.msra.mxu0 0
    %853 = vmatprep.subr.bf16.mxu0 0
    %854 = vmatpush2.bf16.msra.mxu0 0
    %855 = vmatprep.subr.bf16.mxu0 0
    %856 = vmatpush2.bf16.msra.mxu0 0
    %857 = vmatprep.mubr.bf16.mxu0 0
    %858 = vmatmul.mubr.bf16.gmra.mxu0 %v781
    %v859 = vpop.f32.mrf.mxu0
    %v860 = vadd.f32 %v498, %v859
    %v861 = vpop.f32.mrf.mxu0
    %v862 = vpop.f32.mrf.mxu0
    %v863 = vadd.f32 %v498, %v862
    %v864 = vpop.f32.mrf.mxu0
    %865 = vdwg.mxu0
    %v866 = vadd.f32 %v775, %v817
    %v867 = vadd.f32 %v778, %v821
    %v868 = vxor.u32 %v866, 2147483648
    %v869 = vxor.u32 %v867, 2147483648
    %v870 = vmul.f32 %v868, 1.442695
    %v871 = vpow.pop %v870
    %v872 = vmul.f32 %v869, 1.442695
    %v873 = vpow.pop %v872
    %v874 = vadd.f32 %v871, 1.0
    %v875 = vadd.f32 %v873, 1.0
    %v876 = vrcp.pop %v874
    %v877 = vmul.f32 1.0, %v876
    %v878 = vrcp.pop %v875
    %v879 = vmul.f32 1.0, %v878
    %v880 = vadd.f32 %v776, %v819
    %v881 = vadd.f32 %v779, %v823
    %v882 = vxor.u32 %v880, 2147483648
    %v883 = vxor.u32 %v881, 2147483648
    %v884 = vmul.f32 %v882, 1.442695
    %v885 = vpow.pop %v884
    %v886 = vmul.f32 %v883, 1.442695
    %v887 = vpow.pop %v886
    %v888 = vadd.f32 %v885, 1.0
    %v889 = vadd.f32 %v887, 1.0
    %v890 = vrcp.pop %v888
    %v891 = vmul.f32 1.0, %v890
    %v892 = vrcp.pop %v889
    %v893 = vmul.f32 1.0, %v892
    %v894 = vmul.f32 %v877, %v860
    %v895 = vmul.f32 %v879, %v863
    %v896 = vadd.f32 %v777, %v894
    %v897 = vadd.f32 %v780, %v895
    %v898 = vtanh.pop %v896
    %v899 = vtanh.pop %v897
    %v900 = vsub.f32 1.0, %v891
    %v901 = vsub.f32 1.0, %v893
    %v902 = vmul.f32 %v900, %v898
    %v903 = vmul.f32 %v901, %v899
    %v904 = vmul.f32 %v891, %v770
    %v905 = vmul.f32 %v893, %v771
    %v906 = vadd.f32 %v902, %v904
    %v907 = vadd.f32 %v903, %v905
    %s908 = scalar_lea.vmem %s1, 16
    %v909 = vld [vmem:[%s908] sm:$0xff]
    %v910 = vld [vmem:[%s908 + $0x8] sm:$0xff]
    %v911 = vsub.f32 %v906, %v770
    %v912 = vsub.f32 %v907, %v771
    %914 = vset.pattern.permute.xlu0 0
    %915 = vperm.xlu0 %914, %v909
    %v916 = vpop.permute.xlu0 %915
    %919 = vset.pattern.permute.xlu0 0
    %920 = vperm.xlu0 %919, %v910
    %v921 = vpop.permute.xlu0 %920
    %v923 = vmul.f32 %v916, %v911
    %v924 = vmul.f32 %v921, %v912
    %v925 = vadd.f32 %v770, %v923
    %v926 = vadd.f32 %v771, %v924
    %s927 = smul.u32 4, 3
    %s928 = smul.addr %s927, 8
    %s929 = scalar_lea.vmem [#allocation2], %s928
    %v930 = vld [vmem:[%s929] sm:$0xff]
    %v931 = vld [vmem:[%s929 + $0x8] sm:$0xff]
    %v932 = vld [vmem:[%s929 + $0x10] sm:$0xff]
    %v933 = vld [vmem:[%s929 + $0x18] sm:$0xff]
    %v934 = vld [vmem:[%s929 + $0x20] sm:$0xff]
    %v935 = vld [vmem:[%s929 + $0x28] sm:$0xff]
    %v936 = vpack.c.bf16 %v926, %v925
    %937 = vmatprep.subr.bf16.mxu0 %v604
    %938 = vmatpush1.bf16.msra.mxu0 %v603
    %939 = vmatprep.subr.bf16.mxu0 %v601
    %940 = vmatpush1.bf16.msra.mxu0 %v600
    %941 = vmatprep.subr.bf16.mxu0 %v598
    %942 = vmatpush1.bf16.msra.mxu0 %v597
    %943 = vmatprep.subr.bf16.mxu0 %v595
    %944 = vmatpush1.bf16.msra.mxu0 %v594
    %945 = vmatprep.subr.bf16.mxu0 %v592
    %946 = vmatpush1.bf16.msra.mxu0 %v591
    %947 = vmatprep.subr.bf16.mxu0 %v589
    %948 = vmatpush1.bf16.msra.mxu0 %v588
    %949 = vmatprep.subr.bf16.mxu0 %v586
    %950 = vmatpush1.bf16.msra.mxu0 %v585
    %951 = vmatprep.subr.bf16.mxu0 %v583
    %952 = vmatpush1.bf16.msra.mxu0 %v582
    %953 = vmatprep.subr.bf16.mxu0 0
    %954 = vmatpush2.bf16.msra.mxu0 0
    %955 = vmatprep.subr.bf16.mxu0 0
    %956 = vmatpush2.bf16.msra.mxu0 0
    %957 = vmatprep.subr.bf16.mxu0 0
    %958 = vmatpush2.bf16.msra.mxu0 0
    %959 = vmatprep.subr.bf16.mxu0 0
    %960 = vmatpush2.bf16.msra.mxu0 0
    %961 = vmatprep.subr.bf16.mxu0 0
    %962 = vmatpush2.bf16.msra.mxu0 0
    %963 = vmatprep.subr.bf16.mxu0 0
    %964 = vmatpush2.bf16.msra.mxu0 0
    %965 = vmatprep.subr.bf16.mxu0 0
    %966 = vmatpush2.bf16.msra.mxu0 0
    %967 = vmatprep.subr.bf16.mxu0 0
    %968 = vmatpush2.bf16.msra.mxu0 0
    %969 = vmatprep.mubr.bf16.mxu0 0
    %970 = vmatmul.mubr.bf16.gmra.mxu0 %v936
    %v971 = vpop.f32.mrf.mxu0
    %v972 = vadd.f32 %v490, %v971
    %v973 = vpop.f32.mrf.mxu0
    %v974 = vadd.f32 %v494, %v973
    %v975 = vpop.f32.mrf.mxu0
    %v976 = vadd.f32 %v490, %v975
    %v977 = vpop.f32.mrf.mxu0
    %v978 = vadd.f32 %v494, %v977
    %979 = vdwg.mxu0
    %980 = vmatprep.subr.bf16.mxu0 0
    %981 = vmatpush1.bf16.msra.mxu0 %v605
    %982 = vmatprep.subr.bf16.mxu0 0
    %983 = vmatpush1.bf16.msra.mxu0 %v602
    %984 = vmatprep.subr.bf16.mxu0 0
    %985 = vmatpush1.bf16.msra.mxu0 %v599
    %986 = vmatprep.subr.bf16.mxu0 0
    %987 = vmatpush1.bf16.msra.mxu0 %v596
    %988 = vmatprep.subr.bf16.mxu0 0
    %989 = vmatpush1.bf16.msra.mxu0 %v593
    %990 = vmatprep.subr.bf16.mxu0 0
    %991 = vmatpush1.bf16.msra.mxu0 %v590
    %992 = vmatprep.subr.bf16.mxu0 0
    %993 = vmatpush1.bf16.msra.mxu0 %v587
    %994 = vmatprep.subr.bf16.mxu0 0
    %995 = vmatpush1.bf16.msra.mxu0 %v584
    %996 = vmatprep.subr.bf16.mxu0 0
    %997 = vmatpush2.bf16.msra.mxu0 0
    %998 = vmatprep.subr.bf16.mxu0 0
    %999 = vmatpush2.bf16.msra.mxu0 0
    %1000 = vmatprep.subr.bf16.mxu0 0
    %1001 = vmatpush2.bf16.msra.mxu0 0
    %1002 = vmatprep.subr.bf16.mxu0 0
    %1003 = vmatpush2.bf16.msra.mxu0 0
    %1004 = vmatprep.subr.bf16.mxu0 0
    %1005 = vmatpush2.bf16.msra.mxu0 0
    %1006 = vmatprep.subr.bf16.mxu0 0
    %1007 = vmatpush2.bf16.msra.mxu0 0
    %1008 = vmatprep.subr.bf16.mxu0 0
    %1009 = vmatpush2.bf16.msra.mxu0 0
    %1010 = vmatprep.subr.bf16.mxu0 0
    %1011 = vmatpush2.bf16.msra.mxu0 0
    %1012 = vmatprep.mubr.bf16.mxu0 0
    %1013 = vmatmul.mubr.bf16.gmra.mxu0 %v936
    %v1014 = vpop.f32.mrf.mxu0
    %v1015 = vadd.f32 %v498, %v1014
    %v1016 = vpop.f32.mrf.mxu0
    %v1017 = vpop.f32.mrf.mxu0
    %v1018 = vadd.f32 %v498, %v1017
    %v1019 = vpop.f32.mrf.mxu0
    %1020 = vdwg.mxu0
    %v1021 = vadd.f32 %v930, %v972
    %v1022 = vadd.f32 %v933, %v976
    %v1023 = vxor.u32 %v1021, 2147483648
    %v1024 = vxor.u32 %v1022, 2147483648
    %v1025 = vmul.f32 %v1023, 1.442695
    %v1026 = vpow.pop %v1025
    %v1027 = vmul.f32 %v1024, 1.442695
    %v1028 = vpow.pop %v1027
    %v1029 = vadd.f32 %v1026, 1.0
    %v1030 = vadd.f32 %v1028, 1.0
    %v1031 = vrcp.pop %v1029
    %v1032 = vmul.f32 1.0, %v1031
    %v1033 = vrcp.pop %v1030
    %v1034 = vmul.f32 1.0, %v1033
    %v1035 = vadd.f32 %v931, %v974
    %v1036 = vadd.f32 %v934, %v978
    %v1037 = vxor.u32 %v1035, 2147483648
    %v1038 = vxor.u32 %v1036, 2147483648
    %v1039 = vmul.f32 %v1037, 1.442695
    %v1040 = vpow.pop %v1039
    %v1041 = vmul.f32 %v1038, 1.442695
    %v1042 = vpow.pop %v1041
    %v1043 = vadd.f32 %v1040, 1.0
    %v1044 = vadd.f32 %v1042, 1.0
    %v1045 = vrcp.pop %v1043
    %v1046 = vmul.f32 1.0, %v1045
    %v1047 = vrcp.pop %v1044
    %v1048 = vmul.f32 1.0, %v1047
    %v1049 = vmul.f32 %v1032, %v1015
    %v1050 = vmul.f32 %v1034, %v1018
    %v1051 = vadd.f32 %v932, %v1049
    %v1052 = vadd.f32 %v935, %v1050
    %v1053 = vtanh.pop %v1051
    %v1054 = vtanh.pop %v1052
    %v1055 = vsub.f32 1.0, %v1046
    %v1056 = vsub.f32 1.0, %v1048
    %v1057 = vmul.f32 %v1055, %v1053
    %v1058 = vmul.f32 %v1056, %v1054
    %v1059 = vmul.f32 %v1046, %v925
    %v1060 = vmul.f32 %v1048, %v926
    %v1061 = vadd.f32 %v1057, %v1059
    %v1062 = vadd.f32 %v1058, %v1060
    %s1063 = scalar_lea.vmem %s1, 32
    %v1064 = vld [vmem:[%s1063] sm:$0xff]
    %v1065 = vld [vmem:[%s1063 + $0x8] sm:$0xff]
    %v1066 = vsub.f32 %v1061, %v925
    %v1067 = vsub.f32 %v1062, %v926
    %1069 = vset.pattern.permute.xlu0 0
    %1070 = vperm.xlu0 %1069, %v1064
    %v1071 = vpop.permute.xlu0 %1070
    %1074 = vset.pattern.permute.xlu0 0
    %1075 = vperm.xlu0 %1074, %v1065
    %v1076 = vpop.permute.xlu0 %1075
    %v1078 = vmul.f32 %v1071, %v1066
    %v1079 = vmul.f32 %v1076, %v1067
    %v1080 = vadd.f32 %v925, %v1078
    %v1081 = vadd.f32 %v926, %v1079
    %s1082 = smul.u32 6, 3
    %s1083 = smul.addr %s1082, 8
    %s1084 = scalar_lea.vmem [#allocation2], %s1083
    %v1085 = vld [vmem:[%s1084] sm:$0xff]
    %v1086 = vld [vmem:[%s1084 + $0x8] sm:$0xff]
    %v1087 = vld [vmem:[%s1084 + $0x10] sm:$0xff]
    %v1088 = vld [vmem:[%s1084 + $0x18] sm:$0xff]
    %v1089 = vld [vmem:[%s1084 + $0x20] sm:$0xff]
    %v1090 = vld [vmem:[%s1084 + $0x28] sm:$0xff]
    %v1091 = vpack.c.bf16 %v1081, %v1080
    %1092 = vmatprep.subr.bf16.mxu0 %v604
    %1093 = vmatpush1.bf16.msra.mxu0 %v603
    %1094 = vmatprep.subr.bf16.mxu0 %v601
    %1095 = vmatpush1.bf16.msra.mxu0 %v600
    %1096 = vmatprep.subr.bf16.mxu0 %v598
    %1097 = vmatpush1.bf16.msra.mxu0 %v597
    %1098 = vmatprep.subr.bf16.mxu0 %v595
    %1099 = vmatpush1.bf16.msra.mxu0 %v594
    %1100 = vmatprep.subr.bf16.mxu0 %v592
    %1101 = vmatpush1.bf16.msra.mxu0 %v591
    %1102 = vmatprep.subr.bf16.mxu0 %v589
    %1103 = vmatpush1.bf16.msra.mxu0 %v588
    %1104 = vmatprep.subr.bf16.mxu0 %v586
    %1105 = vmatpush1.bf16.msra.mxu0 %v585
    %1106 = vmatprep.subr.bf16.mxu0 %v583
    %1107 = vmatpush1.bf16.msra.mxu0 %v582
    %1108 = vmatprep.subr.bf16.mxu0 0
    %1109 = vmatpush2.bf16.msra.mxu0 0
    %1110 = vmatprep.subr.bf16.mxu0 0
    %1111 = vmatpush2.bf16.msra.mxu0 0
    %1112 = vmatprep.subr.bf16.mxu0 0
    %1113 = vmatpush2.bf16.msra.mxu0 0
    %1114 = vmatprep.subr.bf16.mxu0 0
    %1115 = vmatpush2.bf16.msra.mxu0 0
    %1116 = vmatprep.subr.bf16.mxu0 0
    %1117 = vmatpush2.bf16.msra.mxu0 0
    %1118 = vmatprep.subr.bf16.mxu0 0
    %1119 = vmatpush2.bf16.msra.mxu0 0
    %1120 = vmatprep.subr.bf16.mxu0 0
    %1121 = vmatpush2.bf16.msra.mxu0 0
    %1122 = vmatprep.subr.bf16.mxu0 0
    %1123 = vmatpush2.bf16.msra.mxu0 0
    %1124 = vmatprep.mubr.bf16.mxu0 0
    %1125 = vmatmul.mubr.bf16.gmra.mxu0 %v1091
    %v1126 = vpop.f32.mrf.mxu0
    %v1127 = vadd.f32 %v490, %v1126
    %v1128 = vpop.f32.mrf.mxu0
    %v1129 = vadd.f32 %v494, %v1128
    %v1130 = vpop.f32.mrf.mxu0
    %v1131 = vadd.f32 %v490, %v1130
    %v1132 = vpop.f32.mrf.mxu0
    %v1133 = vadd.f32 %v494, %v1132
    %1134 = vdwg.mxu0
    %1135 = vmatprep.subr.bf16.mxu0 0
    %1136 = vmatpush1.bf16.msra.mxu0 %v605
    %1137 = vmatprep.subr.bf16.mxu0 0
    %1138 = vmatpush1.bf16.msra.mxu0 %v602
    %1139 = vmatprep.subr.bf16.mxu0 0
    %1140 = vmatpush1.bf16.msra.mxu0 %v599
    %1141 = vmatprep.subr.bf16.mxu0 0
    %1142 = vmatpush1.bf16.msra.mxu0 %v596
    %1143 = vmatprep.subr.bf16.mxu0 0
    %1144 = vmatpush1.bf16.msra.mxu0 %v593
    %1145 = vmatprep.subr.bf16.mxu0 0
    %1146 = vmatpush1.bf16.msra.mxu0 %v590
    %1147 = vmatprep.subr.bf16.mxu0 0
    %1148 = vmatpush1.bf16.msra.mxu0 %v587
    %1149 = vmatprep.subr.bf16.mxu0 0
    %1150 = vmatpush1.bf16.msra.mxu0 %v584
    %1151 = vmatprep.subr.bf16.mxu0 0
    %1152 = vmatpush2.bf16.msra.mxu0 0
    %1153 = vmatprep.subr.bf16.mxu0 0
    %1154 = vmatpush2.bf16.msra.mxu0 0
    %1155 = vmatprep.subr.bf16.mxu0 0
    %1156 = vmatpush2.bf16.msra.mxu0 0
    %1157 = vmatprep.subr.bf16.mxu0 0
    %1158 = vmatpush2.bf16.msra.mxu0 0
    %1159 = vmatprep.subr.bf16.mxu0 0
    %1160 = vmatpush2.bf16.msra.mxu0 0
    %1161 = vmatprep.subr.bf16.mxu0 0
    %1162 = vmatpush2.bf16.msra.mxu0 0
    %1163 = vmatprep.subr.bf16.mxu0 0
    %1164 = vmatpush2.bf16.msra.mxu0 0
    %1165 = vmatprep.subr.bf16.mxu0 0
    %1166 = vmatpush2.bf16.msra.mxu0 0
    %1167 = vmatprep.mubr.bf16.mxu0 0
    %1168 = vmatmul.mubr.bf16.gmra.mxu0 %v1091
    %v1169 = vpop.f32.mrf.mxu0
    %v1170 = vadd.f32 %v498, %v1169
    %v1171 = vpop.f32.mrf.mxu0
    %v1172 = vpop.f32.mrf.mxu0
    %v1173 = vadd.f32 %v498, %v1172
    %v1174 = vpop.f32.mrf.mxu0
    %1175 = vdwg.mxu0
    %v1176 = vadd.f32 %v1085, %v1127
    %v1177 = vadd.f32 %v1088, %v1131
    %v1178 = vxor.u32 %v1176, 2147483648
    %v1179 = vxor.u32 %v1177, 2147483648
    %v1180 = vmul.f32 %v1178, 1.442695
    %v1181 = vpow.pop %v1180
    %v1182 = vmul.f32 %v1179, 1.442695
    %v1183 = vpow.pop %v1182
    %v1184 = vadd.f32 %v1181, 1.0
    %v1185 = vadd.f32 %v1183, 1.0
    %v1186 = vrcp.pop %v1184
    %v1187 = vmul.f32 1.0, %v1186
    %v1188 = vrcp.pop %v1185
    %v1189 = vmul.f32 1.0, %v1188
    %v1190 = vadd.f32 %v1086, %v1129
    %v1191 = vadd.f32 %v1089, %v1133
    %v1192 = vxor.u32 %v1190, 2147483648
    %v1193 = vxor.u32 %v1191, 2147483648
    %v1194 = vmul.f32 %v1192, 1.442695
    %v1195 = vpow.pop %v1194
    %v1196 = vmul.f32 %v1193, 1.442695
    %v1197 = vpow.pop %v1196
    %v1198 = vadd.f32 %v1195, 1.0
    %v1199 = vadd.f32 %v1197, 1.0
    %v1200 = vrcp.pop %v1198
    %v1201 = vmul.f32 1.0, %v1200
    %v1202 = vrcp.pop %v1199
    %v1203 = vmul.f32 1.0, %v1202
    %v1204 = vmul.f32 %v1187, %v1170
    %v1205 = vmul.f32 %v1189, %v1173
    %v1206 = vadd.f32 %v1087, %v1204
    %v1207 = vadd.f32 %v1090, %v1205
    %v1208 = vtanh.pop %v1206
    %v1209 = vtanh.pop %v1207
    %v1210 = vsub.f32 1.0, %v1201
    %v1211 = vsub.f32 1.0, %v1203
    %v1212 = vmul.f32 %v1210, %v1208
    %v1213 = vmul.f32 %v1211, %v1209
    %v1214 = vmul.f32 %v1201, %v1080
    %v1215 = vmul.f32 %v1203, %v1081
    %v1216 = vadd.f32 %v1212, %v1214
    %v1217 = vadd.f32 %v1213, %v1215
    %s1218 = scalar_lea.vmem %s1, 48
    %v1219 = vld [vmem:[%s1218] sm:$0xff]
    %v1220 = vld [vmem:[%s1218 + $0x8] sm:$0xff]
    %v1221 = vsub.f32 %v1216, %v1080
    %v1222 = vsub.f32 %v1217, %v1081
    %1224 = vset.pattern.permute.xlu0 0
    %1225 = vperm.xlu0 %1224, %v1219
    %v1226 = vpop.permute.xlu0 %1225
    %1229 = vset.pattern.permute.xlu0 0
    %1230 = vperm.xlu0 %1229, %v1220
    %v1231 = vpop.permute.xlu0 %1230
    %v1233 = vmul.f32 %v1226, %v1221
    %v1234 = vmul.f32 %v1231, %v1222
    %v1235 = vadd.f32 %v1080, %v1233
    %v1236 = vadd.f32 %v1081, %v1234
    %s1237 = smul.u32 8, 3
    %s1238 = smul.addr %s1237, 8
    %s1239 = scalar_lea.vmem [#allocation2], %s1238
    %v1240 = vld [vmem:[%s1239] sm:$0xff]
    %v1241 = vld [vmem:[%s1239 + $0x8] sm:$0xff]
    %v1242 = vld [vmem:[%s1239 + $0x10] sm:$0xff]
    %v1243 = vld [vmem:[%s1239 + $0x18] sm:$0xff]
    %v1244 = vld [vmem:[%s1239 + $0x20] sm:$0xff]
    %v1245 = vld [vmem:[%s1239 + $0x28] sm:$0xff]
    %v1246 = vpack.c.bf16 %v1236, %v1235
    %1247 = vmatprep.subr.bf16.mxu0 %v604
    %1248 = vmatpush1.bf16.msra.mxu0 %v603
    %1249 = vmatprep.subr.bf16.mxu0 %v601
    %1250 = vmatpush1.bf16.msra.mxu0 %v600
    %1251 = vmatprep.subr.bf16.mxu0 %v598
    %1252 = vmatpush1.bf16.msra.mxu0 %v597
    %1253 = vmatprep.subr.bf16.mxu0 %v595
    %1254 = vmatpush1.bf16.msra.mxu0 %v594
    %1255 = vmatprep.subr.bf16.mxu0 %v592
    %1256 = vmatpush1.bf16.msra.mxu0 %v591
    %1257 = vmatprep.subr.bf16.mxu0 %v589
    %1258 = vmatpush1.bf16.msra.mxu0 %v588
    %1259 = vmatprep.subr.bf16.mxu0 %v586
    %1260 = vmatpush1.bf16.msra.mxu0 %v585
    %1261 = vmatprep.subr.bf16.mxu0 %v583
    %1262 = vmatpush1.bf16.msra.mxu0 %v582
    %1263 = vmatprep.subr.bf16.mxu0 0
    %1264 = vmatpush2.bf16.msra.mxu0 0
    %1265 = vmatprep.subr.bf16.mxu0 0
    %1266 = vmatpush2.bf16.msra.mxu0 0
    %1267 = vmatprep.subr.bf16.mxu0 0
    %1268 = vmatpush2.bf16.msra.mxu0 0
    %1269 = vmatprep.subr.bf16.mxu0 0
    %1270 = vmatpush2.bf16.msra.mxu0 0
    %1271 = vmatprep.subr.bf16.mxu0 0
    %1272 = vmatpush2.bf16.msra.mxu0 0
    %1273 = vmatprep.subr.bf16.mxu0 0
    %1274 = vmatpush2.bf16.msra.mxu0 0
    %1275 = vmatprep.subr.bf16.mxu0 0
    %1276 = vmatpush2.bf16.msra.mxu0 0
    %1277 = vmatprep.subr.bf16.mxu0 0
    %1278 = vmatpush2.bf16.msra.mxu0 0
    %1279 = vmatprep.mubr.bf16.mxu0 0
    %1280 = vmatmul.mubr.bf16.gmra.mxu0 %v1246
    %v1281 = vpop.f32.mrf.mxu0
    %v1282 = vadd.f32 %v490, %v1281
    %v1283 = vpop.f32.mrf.mxu0
    %v1284 = vadd.f32 %v494, %v1283
    %v1285 = vpop.f32.mrf.mxu0
    %v1286 = vadd.f32 %v490, %v1285
    %v1287 = vpop.f32.mrf.mxu0
    %v1288 = vadd.f32 %v494, %v1287
    %1289 = vdwg.mxu0
    %1290 = vmatprep.subr.bf16.mxu0 0
    %1291 = vmatpush1.bf16.msra.mxu0 %v605
    %1292 = vmatprep.subr.bf16.mxu0 0
    %1293 = vmatpush1.bf16.msra.mxu0 %v602
    %1294 = vmatprep.subr.bf16.mxu0 0
    %1295 = vmatpush1.bf16.msra.mxu0 %v599
    %1296 = vmatprep.subr.bf16.mxu0 0
    %1297 = vmatpush1.bf16.msra.mxu0 %v596
    %1298 = vmatprep.subr.bf16.mxu0 0
    %1299 = vmatpush1.bf16.msra.mxu0 %v593
    %1300 = vmatprep.subr.bf16.mxu0 0
    %1301 = vmatpush1.bf16.msra.mxu0 %v590
    %1302 = vmatprep.subr.bf16.mxu0 0
    %1303 = vmatpush1.bf16.msra.mxu0 %v587
    %1304 = vmatprep.subr.bf16.mxu0 0
    %1305 = vmatpush1.bf16.msra.mxu0 %v584
    %1306 = vmatprep.subr.bf16.mxu0 0
    %1307 = vmatpush2.bf16.msra.mxu0 0
    %1308 = vmatprep.subr.bf16.mxu0 0
    %1309 = vmatpush2.bf16.msra.mxu0 0
    %1310 = vmatprep.subr.bf16.mxu0 0
    %1311 = vmatpush2.bf16.msra.mxu0 0
    %1312 = vmatprep.subr.bf16.mxu0 0
    %1313 = vmatpush2.bf16.msra.mxu0 0
    %1314 = vmatprep.subr.bf16.mxu0 0
    %1315 = vmatpush2.bf16.msra.mxu0 0
    %1316 = vmatprep.subr.bf16.mxu0 0
    %1317 = vmatpush2.bf16.msra.mxu0 0
    %1318 = vmatprep.subr.bf16.mxu0 0
    %1319 = vmatpush2.bf16.msra.mxu0 0
    %1320 = vmatprep.subr.bf16.mxu0 0
    %1321 = vmatpush2.bf16.msra.mxu0 0
    %1322 = vmatprep.mubr.bf16.mxu0 0
    %1323 = vmatmul.mubr.bf16.gmra.mxu0 %v1246
    %v1324 = vpop.f32.mrf.mxu0
    %v1325 = vadd.f32 %v498, %v1324
    %v1326 = vpop.f32.mrf.mxu0
    %v1327 = vpop.f32.mrf.mxu0
    %v1328 = vadd.f32 %v498, %v1327
    %v1329 = vpop.f32.mrf.mxu0
    %1330 = vdwg.mxu0
    %v1331 = vadd.f32 %v1240, %v1282
    %v1332 = vadd.f32 %v1243, %v1286
    %v1333 = vxor.u32 %v1331, 2147483648
    %v1334 = vxor.u32 %v1332, 2147483648
    %v1335 = vmul.f32 %v1333, 1.442695
    %v1336 = vpow.pop %v1335
    %v1337 = vmul.f32 %v1334, 1.442695
    %v1338 = vpow.pop %v1337
    %v1339 = vadd.f32 %v1336, 1.0
    %v1340 = vadd.f32 %v1338, 1.0
    %v1341 = vrcp.pop %v1339
    %v1342 = vmul.f32 1.0, %v1341
    %v1343 = vrcp.pop %v1340
    %v1344 = vmul.f32 1.0, %v1343
    %v1345 = vadd.f32 %v1241, %v1284
    %v1346 = vadd.f32 %v1244, %v1288
    %v1347 = vxor.u32 %v1345, 2147483648
    %v1348 = vxor.u32 %v1346, 2147483648
    %v1349 = vmul.f32 %v1347, 1.442695
    %v1350 = vpow.pop %v1349
    %v1351 = vmul.f32 %v1348, 1.442695
    %v1352 = vpow.pop %v1351
    %v1353 = vadd.f32 %v1350, 1.0
    %v1354 = vadd.f32 %v1352, 1.0
    %v1355 = vrcp.pop %v1353
    %v1356 = vmul.f32 1.0, %v1355
    %v1357 = vrcp.pop %v1354
    %v1358 = vmul.f32 1.0, %v1357
    %v1359 = vmul.f32 %v1342, %v1325
    %v1360 = vmul.f32 %v1344, %v1328
    %v1361 = vadd.f32 %v1242, %v1359
    %v1362 = vadd.f32 %v1245, %v1360
    %v1363 = vtanh.pop %v1361
    %v1364 = vtanh.pop %v1362
    %v1365 = vsub.f32 1.0, %v1356
    %v1366 = vsub.f32 1.0, %v1358
    %v1367 = vmul.f32 %v1365, %v1363
    %v1368 = vmul.f32 %v1366, %v1364
    %v1369 = vmul.f32 %v1356, %v1235
    %v1370 = vmul.f32 %v1358, %v1236
    %v1371 = vadd.f32 %v1367, %v1369
    %v1372 = vadd.f32 %v1368, %v1370
    %s1373 = scalar_lea.vmem %s1, 64
    %v1374 = vld [vmem:[%s1373] sm:$0xff]
    %v1375 = vld [vmem:[%s1373 + $0x8] sm:$0xff]
    %v1376 = vsub.f32 %v1371, %v1235
    %v1377 = vsub.f32 %v1372, %v1236
    %1379 = vset.pattern.permute.xlu0 0
    %1380 = vperm.xlu0 %1379, %v1374
    %v1381 = vpop.permute.xlu0 %1380
    %1384 = vset.pattern.permute.xlu0 0
    %1385 = vperm.xlu0 %1384, %v1375
    %v1386 = vpop.permute.xlu0 %1385
    %v1388 = vmul.f32 %v1381, %v1376
    %v1389 = vmul.f32 %v1386, %v1377
    %v1390 = vadd.f32 %v1235, %v1388
    %v1391 = vadd.f32 %v1236, %v1389
    %s1392 = smul.u32 10, 3
    %s1393 = smul.addr %s1392, 8
    %s1394 = scalar_lea.vmem [#allocation2], %s1393
    %v1395 = vld [vmem:[%s1394] sm:$0xff]
    %v1396 = vld [vmem:[%s1394 + $0x8] sm:$0xff]
    %v1397 = vld [vmem:[%s1394 + $0x10] sm:$0xff]
    %v1398 = vld [vmem:[%s1394 + $0x18] sm:$0xff]
    %v1399 = vld [vmem:[%s1394 + $0x20] sm:$0xff]
    %v1400 = vld [vmem:[%s1394 + $0x28] sm:$0xff]
    %v1401 = vpack.c.bf16 %v1391, %v1390
    %1402 = vmatprep.subr.bf16.mxu0 %v604
    %1403 = vmatpush1.bf16.msra.mxu0 %v603
    %1404 = vmatprep.subr.bf16.mxu0 %v601
    %1405 = vmatpush1.bf16.msra.mxu0 %v600
    %1406 = vmatprep.subr.bf16.mxu0 %v598
    %1407 = vmatpush1.bf16.msra.mxu0 %v597
    %1408 = vmatprep.subr.bf16.mxu0 %v595
    %1409 = vmatpush1.bf16.msra.mxu0 %v594
    %1410 = vmatprep.subr.bf16.mxu0 %v592
    %1411 = vmatpush1.bf16.msra.mxu0 %v591
    %1412 = vmatprep.subr.bf16.mxu0 %v589
    %1413 = vmatpush1.bf16.msra.mxu0 %v588
    %1414 = vmatprep.subr.bf16.mxu0 %v586
    %1415 = vmatpush1.bf16.msra.mxu0 %v585
    %1416 = vmatprep.subr.bf16.mxu0 %v583
    %1417 = vmatpush1.bf16.msra.mxu0 %v582
    %1418 = vmatprep.subr.bf16.mxu0 0
    %1419 = vmatpush2.bf16.msra.mxu0 0
    %1420 = vmatprep.subr.bf16.mxu0 0
    %1421 = vmatpush2.bf16.msra.mxu0 0
    %1422 = vmatprep.subr.bf16.mxu0 0
    %1423 = vmatpush2.bf16.msra.mxu0 0
    %1424 = vmatprep.subr.bf16.mxu0 0
    %1425 = vmatpush2.bf16.msra.mxu0 0
    %1426 = vmatprep.subr.bf16.mxu0 0
    %1427 = vmatpush2.bf16.msra.mxu0 0
    %1428 = vmatprep.subr.bf16.mxu0 0
    %1429 = vmatpush2.bf16.msra.mxu0 0
    %1430 = vmatprep.subr.bf16.mxu0 0
    %1431 = vmatpush2.bf16.msra.mxu0 0
    %1432 = vmatprep.subr.bf16.mxu0 0
    %1433 = vmatpush2.bf16.msra.mxu0 0
    %1434 = vmatprep.mubr.bf16.mxu0 0
    %1435 = vmatmul.mubr.bf16.gmra.mxu0 %v1401
    %v1436 = vpop.f32.mrf.mxu0
    %v1437 = vadd.f32 %v490, %v1436
    %v1438 = vpop.f32.mrf.mxu0
    %v1439 = vadd.f32 %v494, %v1438
    %v1440 = vpop.f32.mrf.mxu0
    %v1441 = vadd.f32 %v490, %v1440
    %v1442 = vpop.f32.mrf.mxu0
    %v1443 = vadd.f32 %v494, %v1442
    %1444 = vdwg.mxu0
    %1445 = vmatprep.subr.bf16.mxu0 0
    %1446 = vmatpush1.bf16.msra.mxu0 %v605
    %1447 = vmatprep.subr.bf16.mxu0 0
    %1448 = vmatpush1.bf16.msra.mxu0 %v602
    %1449 = vmatprep.subr.bf16.mxu0 0
    %1450 = vmatpush1.bf16.msra.mxu0 %v599
    %1451 = vmatprep.subr.bf16.mxu0 0
    %1452 = vmatpush1.bf16.msra.mxu0 %v596
    %1453 = vmatprep.subr.bf16.mxu0 0
    %1454 = vmatpush1.bf16.msra.mxu0 %v593
    %1455 = vmatprep.subr.bf16.mxu0 0
    %1456 = vmatpush1.bf16.msra.mxu0 %v590
    %1457 = vmatprep.subr.bf16.mxu0 0
    %1458 = vmatpush1.bf16.msra.mxu0 %v587
    %1459 = vmatprep.subr.bf16.mxu0 0
    %1460 = vmatpush1.bf16.msra.mxu0 %v584
    %1461 = vmatprep.subr.bf16.mxu0 0
    %1462 = vmatpush2.bf16.msra.mxu0 0
    %1463 = vmatprep.subr.bf16.mxu0 0
    %1464 = vmatpush2.bf16.msra.mxu0 0
    %1465 = vmatprep.subr.bf16.mxu0 0
    %1466 = vmatpush2.bf16.msra.mxu0 0
    %1467 = vmatprep.subr.bf16.mxu0 0
    %1468 = vmatpush2.bf16.msra.mxu0 0
    %1469 = vmatprep.subr.bf16.mxu0 0
    %1470 = vmatpush2.bf16.msra.mxu0 0
    %1471 = vmatprep.subr.bf16.mxu0 0
    %1472 = vmatpush2.bf16.msra.mxu0 0
    %1473 = vmatprep.subr.bf16.mxu0 0
    %1474 = vmatpush2.bf16.msra.mxu0 0
    %1475 = vmatprep.subr.bf16.mxu0 0
    %1476 = vmatpush2.bf16.msra.mxu0 0
    %1477 = vmatprep.mubr.bf16.mxu0 0
    %1478 = vmatmul.mubr.bf16.gmra.mxu0 %v1401
    %v1479 = vpop.f32.mrf.mxu0
    %v1480 = vadd.f32 %v498, %v1479
    %v1481 = vpop.f32.mrf.mxu0
    %v1482 = vpop.f32.mrf.mxu0
    %v1483 = vadd.f32 %v498, %v1482
    %v1484 = vpop.f32.mrf.mxu0
    %1485 = vdwg.mxu0
    %v1486 = vadd.f32 %v1395, %v1437
    %v1487 = vadd.f32 %v1398, %v1441
    %v1488 = vxor.u32 %v1486, 2147483648
    %v1489 = vxor.u32 %v1487, 2147483648
    %v1490 = vmul.f32 %v1488, 1.442695
    %v1491 = vpow.pop %v1490
    %v1492 = vmul.f32 %v1489, 1.442695
    %v1493 = vpow.pop %v1492
    %v1494 = vadd.f32 %v1491, 1.0
    %v1495 = vadd.f32 %v1493, 1.0
    %v1496 = vrcp.pop %v1494
    %v1497 = vmul.f32 1.0, %v1496
    %v1498 = vrcp.pop %v1495
    %v1499 = vmul.f32 1.0, %v1498
    %v1500 = vadd.f32 %v1396, %v1439
    %v1501 = vadd.f32 %v1399, %v1443
    %v1502 = vxor.u32 %v1500, 2147483648
    %v1503 = vxor.u32 %v1501, 2147483648
    %v1504 = vmul.f32 %v1502, 1.442695
    %v1505 = vpow.pop %v1504
    %v1506 = vmul.f32 %v1503, 1.442695
    %v1507 = vpow.pop %v1506
    %v1508 = vadd.f32 %v1505, 1.0
    %v1509 = vadd.f32 %v1507, 1.0
    %v1510 = vrcp.pop %v1508
    %v1511 = vmul.f32 1.0, %v1510
    %v1512 = vrcp.pop %v1509
    %v1513 = vmul.f32 1.0, %v1512
    %v1514 = vmul.f32 %v1497, %v1480
    %v1515 = vmul.f32 %v1499, %v1483
    %v1516 = vadd.f32 %v1397, %v1514
    %v1517 = vadd.f32 %v1400, %v1515
    %v1518 = vtanh.pop %v1516
    %v1519 = vtanh.pop %v1517
    %v1520 = vsub.f32 1.0, %v1511
    %v1521 = vsub.f32 1.0, %v1513
    %v1522 = vmul.f32 %v1520, %v1518
    %v1523 = vmul.f32 %v1521, %v1519
    %v1524 = vmul.f32 %v1511, %v1390
    %v1525 = vmul.f32 %v1513, %v1391
    %v1526 = vadd.f32 %v1522, %v1524
    %v1527 = vadd.f32 %v1523, %v1525
    %s1528 = scalar_lea.vmem %s1, 80
    %v1529 = vld [vmem:[%s1528] sm:$0xff]
    %v1530 = vld [vmem:[%s1528 + $0x8] sm:$0xff]
    %v1531 = vsub.f32 %v1526, %v1390
    %v1532 = vsub.f32 %v1527, %v1391
    %1534 = vset.pattern.permute.xlu0 0
    %1535 = vperm.xlu0 %1534, %v1529
    %v1536 = vpop.permute.xlu0 %1535
    %1539 = vset.pattern.permute.xlu0 0
    %1540 = vperm.xlu0 %1539, %v1530
    %v1541 = vpop.permute.xlu0 %1540
    %v1543 = vmul.f32 %v1536, %v1531
    %v1544 = vmul.f32 %v1541, %v1532
    %v1545 = vadd.f32 %v1390, %v1543
    %v1546 = vadd.f32 %v1391, %v1544
    %s1547 = smul.u32 12, 3
    %s1548 = smul.addr %s1547, 8
    %s1549 = scalar_lea.vmem [#allocation2], %s1548
    %v1550 = vld [vmem:[%s1549] sm:$0xff]
    %v1551 = vld [vmem:[%s1549 + $0x8] sm:$0xff]
    %v1552 = vld [vmem:[%s1549 + $0x10] sm:$0xff]
    %v1553 = vld [vmem:[%s1549 + $0x18] sm:$0xff]
    %v1554 = vld [vmem:[%s1549 + $0x20] sm:$0xff]
    %v1555 = vld [vmem:[%s1549 + $0x28] sm:$0xff]
    %v1556 = vpack.c.bf16 %v1546, %v1545
    %1557 = vmatprep.subr.bf16.mxu0 %v604
    %1558 = vmatpush1.bf16.msra.mxu0 %v603
    %1559 = vmatprep.subr.bf16.mxu0 %v601
    %1560 = vmatpush1.bf16.msra.mxu0 %v600
    %1561 = vmatprep.subr.bf16.mxu0 %v598
    %1562 = vmatpush1.bf16.msra.mxu0 %v597
    %1563 = vmatprep.subr.bf16.mxu0 %v595
    %1564 = vmatpush1.bf16.msra.mxu0 %v594
    %1565 = vmatprep.subr.bf16.mxu0 %v592
    %1566 = vmatpush1.bf16.msra.mxu0 %v591
    %1567 = vmatprep.subr.bf16.mxu0 %v589
    %1568 = vmatpush1.bf16.msra.mxu0 %v588
    %1569 = vmatprep.subr.bf16.mxu0 %v586
    %1570 = vmatpush1.bf16.msra.mxu0 %v585
    %1571 = vmatprep.subr.bf16.mxu0 %v583
    %1572 = vmatpush1.bf16.msra.mxu0 %v582
    %1573 = vmatprep.subr.bf16.mxu0 0
    %1574 = vmatpush2.bf16.msra.mxu0 0
    %1575 = vmatprep.subr.bf16.mxu0 0
    %1576 = vmatpush2.bf16.msra.mxu0 0
    %1577 = vmatprep.subr.bf16.mxu0 0
    %1578 = vmatpush2.bf16.msra.mxu0 0
    %1579 = vmatprep.subr.bf16.mxu0 0
    %1580 = vmatpush2.bf16.msra.mxu0 0
    %1581 = vmatprep.subr.bf16.mxu0 0
    %1582 = vmatpush2.bf16.msra.mxu0 0
    %1583 = vmatprep.subr.bf16.mxu0 0
    %1584 = vmatpush2.bf16.msra.mxu0 0
    %1585 = vmatprep.subr.bf16.mxu0 0
    %1586 = vmatpush2.bf16.msra.mxu0 0
    %1587 = vmatprep.subr.bf16.mxu0 0
    %1588 = vmatpush2.bf16.msra.mxu0 0
    %1589 = vmatprep.mubr.bf16.mxu0 0
    %1590 = vmatmul.mubr.bf16.gmra.mxu0 %v1556
    %v1591 = vpop.f32.mrf.mxu0
    %v1592 = vadd.f32 %v490, %v1591
    %v1593 = vpop.f32.mrf.mxu0
    %v1594 = vadd.f32 %v494, %v1593
    %v1595 = vpop.f32.mrf.mxu0
    %v1596 = vadd.f32 %v490, %v1595
    %v1597 = vpop.f32.mrf.mxu0
    %v1598 = vadd.f32 %v494, %v1597
    %1599 = vdwg.mxu0
    %1600 = vmatprep.subr.bf16.mxu0 0
    %1601 = vmatpush1.bf16.msra.mxu0 %v605
    %1602 = vmatprep.subr.bf16.mxu0 0
    %1603 = vmatpush1.bf16.msra.mxu0 %v602
    %1604 = vmatprep.subr.bf16.mxu0 0
    %1605 = vmatpush1.bf16.msra.mxu0 %v599
    %1606 = vmatprep.subr.bf16.mxu0 0
    %1607 = vmatpush1.bf16.msra.mxu0 %v596
    %1608 = vmatprep.subr.bf16.mxu0 0
    %1609 = vmatpush1.bf16.msra.mxu0 %v593
    %1610 = vmatprep.subr.bf16.mxu0 0
    %1611 = vmatpush1.bf16.msra.mxu0 %v590
    %1612 = vmatprep.subr.bf16.mxu0 0
    %1613 = vmatpush1.bf16.msra.mxu0 %v587
    %1614 = vmatprep.subr.bf16.mxu0 0
    %1615 = vmatpush1.bf16.msra.mxu0 %v584
    %1616 = vmatprep.subr.bf16.mxu0 0
    %1617 = vmatpush2.bf16.msra.mxu0 0
    %1618 = vmatprep.subr.bf16.mxu0 0
    %1619 = vmatpush2.bf16.msra.mxu0 0
    %1620 = vmatprep.subr.bf16.mxu0 0
    %1621 = vmatpush2.bf16.msra.mxu0 0
    %1622 = vmatprep.subr.bf16.mxu0 0
    %1623 = vmatpush2.bf16.msra.mxu0 0
    %1624 = vmatprep.subr.bf16.mxu0 0
    %1625 = vmatpush2.bf16.msra.mxu0 0
    %1626 = vmatprep.subr.bf16.mxu0 0
    %1627 = vmatpush2.bf16.msra.mxu0 0
    %1628 = vmatprep.subr.bf16.mxu0 0
    %1629 = vmatpush2.bf16.msra.mxu0 0
    %1630 = vmatprep.subr.bf16.mxu0 0
    %1631 = vmatpush2.bf16.msra.mxu0 0
    %1632 = vmatprep.mubr.bf16.mxu0 0
    %1633 = vmatmul.mubr.bf16.gmra.mxu0 %v1556
    %v1634 = vpop.f32.mrf.mxu0
    %v1635 = vadd.f32 %v498, %v1634
    %v1636 = vpop.f32.mrf.mxu0
    %v1637 = vpop.f32.mrf.mxu0
    %v1638 = vadd.f32 %v498, %v1637
    %v1639 = vpop.f32.mrf.mxu0
    %1640 = vdwg.mxu0
    %v1641 = vadd.f32 %v1550, %v1592
    %v1642 = vadd.f32 %v1553, %v1596
    %v1643 = vxor.u32 %v1641, 2147483648
    %v1644 = vxor.u32 %v1642, 2147483648
    %v1645 = vmul.f32 %v1643, 1.442695
    %v1646 = vpow.pop %v1645
    %v1647 = vmul.f32 %v1644, 1.442695
    %v1648 = vpow.pop %v1647
    %v1649 = vadd.f32 %v1646, 1.0
    %v1650 = vadd.f32 %v1648, 1.0
    %v1651 = vrcp.pop %v1649
    %v1652 = vmul.f32 1.0, %v1651
    %v1653 = vrcp.pop %v1650
    %v1654 = vmul.f32 1.0, %v1653
    %v1655 = vadd.f32 %v1551, %v1594
    %v1656 = vadd.f32 %v1554, %v1598
    %v1657 = vxor.u32 %v1655, 2147483648
    %v1658 = vxor.u32 %v1656, 2147483648
    %v1659 = vmul.f32 %v1657, 1.442695
    %v1660 = vpow.pop %v1659
    %v1661 = vmul.f32 %v1658, 1.442695
    %v1662 = vpow.pop %v1661
    %v1663 = vadd.f32 %v1660, 1.0
    %v1664 = vadd.f32 %v1662, 1.0
    %v1665 = vrcp.pop %v1663
    %v1666 = vmul.f32 1.0, %v1665
    %v1667 = vrcp.pop %v1664
    %v1668 = vmul.f32 1.0, %v1667
    %v1669 = vmul.f32 %v1652, %v1635
    %v1670 = vmul.f32 %v1654, %v1638
    %v1671 = vadd.f32 %v1552, %v1669
    %v1672 = vadd.f32 %v1555, %v1670
    %v1673 = vtanh.pop %v1671
    %v1674 = vtanh.pop %v1672
    %v1675 = vsub.f32 1.0, %v1666
    %v1676 = vsub.f32 1.0, %v1668
    %v1677 = vmul.f32 %v1675, %v1673
    %v1678 = vmul.f32 %v1676, %v1674
    %v1679 = vmul.f32 %v1666, %v1545
    %v1680 = vmul.f32 %v1668, %v1546
    %v1681 = vadd.f32 %v1677, %v1679
    %v1682 = vadd.f32 %v1678, %v1680
    %s1683 = scalar_lea.vmem %s1, 96
    %v1684 = vld [vmem:[%s1683] sm:$0xff]
    %v1685 = vld [vmem:[%s1683 + $0x8] sm:$0xff]
    %v1686 = vsub.f32 %v1681, %v1545
    %v1687 = vsub.f32 %v1682, %v1546
    %1689 = vset.pattern.permute.xlu0 0
    %1690 = vperm.xlu0 %1689, %v1684
    %v1691 = vpop.permute.xlu0 %1690
    %1694 = vset.pattern.permute.xlu0 0
    %1695 = vperm.xlu0 %1694, %v1685
    %v1696 = vpop.permute.xlu0 %1695
    %v1698 = vmul.f32 %v1691, %v1686
    %v1699 = vmul.f32 %v1696, %v1687
    %v1700 = vadd.f32 %v1545, %v1698
    %v1701 = vadd.f32 %v1546, %v1699
    %s1702 = smul.u32 14, 3
    %s1703 = smul.addr %s1702, 8
    %s1704 = scalar_lea.vmem [#allocation2], %s1703
    %v1705 = vld [vmem:[%s1704] sm:$0xff]
    %v1706 = vld [vmem:[%s1704 + $0x8] sm:$0xff]
    %v1707 = vld [vmem:[%s1704 + $0x10] sm:$0xff]
    %v1708 = vld [vmem:[%s1704 + $0x18] sm:$0xff]
    %v1709 = vld [vmem:[%s1704 + $0x20] sm:$0xff]
    %v1710 = vld [vmem:[%s1704 + $0x28] sm:$0xff]
    %v1711 = vpack.c.bf16 %v1701, %v1700
    %1712 = vmatprep.subr.bf16.mxu0 %v604
    %1713 = vmatpush1.bf16.msra.mxu0 %v603
    %1714 = vmatprep.subr.bf16.mxu0 %v601
    %1715 = vmatpush1.bf16.msra.mxu0 %v600
    %1716 = vmatprep.subr.bf16.mxu0 %v598
    %1717 = vmatpush1.bf16.msra.mxu0 %v597
    %1718 = vmatprep.subr.bf16.mxu0 %v595
    %1719 = vmatpush1.bf16.msra.mxu0 %v594
    %1720 = vmatprep.subr.bf16.mxu0 %v592
    %1721 = vmatpush1.bf16.msra.mxu0 %v591
    %1722 = vmatprep.subr.bf16.mxu0 %v589
    %1723 = vmatpush1.bf16.msra.mxu0 %v588
    %1724 = vmatprep.subr.bf16.mxu0 %v586
    %1725 = vmatpush1.bf16.msra.mxu0 %v585
    %1726 = vmatprep.subr.bf16.mxu0 %v583
    %1727 = vmatpush1.bf16.msra.mxu0 %v582
    %1728 = vmatprep.subr.bf16.mxu0 0
    %1729 = vmatpush2.bf16.msra.mxu0 0
    %1730 = vmatprep.subr.bf16.mxu0 0
    %1731 = vmatpush2.bf16.msra.mxu0 0
    %1732 = vmatprep.subr.bf16.mxu0 0
    %1733 = vmatpush2.bf16.msra.mxu0 0
    %1734 = vmatprep.subr.bf16.mxu0 0
    %1735 = vmatpush2.bf16.msra.mxu0 0
    %1736 = vmatprep.subr.bf16.mxu0 0
    %1737 = vmatpush2.bf16.msra.mxu0 0
    %1738 = vmatprep.subr.bf16.mxu0 0
    %1739 = vmatpush2.bf16.msra.mxu0 0
    %1740 = vmatprep.subr.bf16.mxu0 0
    %1741 = vmatpush2.bf16.msra.mxu0 0
    %1742 = vmatprep.subr.bf16.mxu0 0
    %1743 = vmatpush2.bf16.msra.mxu0 0
    %1744 = vmatprep.mubr.bf16.mxu0 0
    %1745 = vmatmul.mubr.bf16.gmra.mxu0 %v1711
    %v1746 = vpop.f32.mrf.mxu0
    %v1747 = vadd.f32 %v490, %v1746
    %v1748 = vpop.f32.mrf.mxu0
    %v1749 = vadd.f32 %v494, %v1748
    %v1750 = vpop.f32.mrf.mxu0
    %v1751 = vadd.f32 %v490, %v1750
    %v1752 = vpop.f32.mrf.mxu0
    %v1753 = vadd.f32 %v494, %v1752
    %1754 = vdwg.mxu0
    %1755 = vmatprep.subr.bf16.mxu0 0
    %1756 = vmatpush1.bf16.msra.mxu0 %v605
    %1757 = vmatprep.subr.bf16.mxu0 0
    %1758 = vmatpush1.bf16.msra.mxu0 %v602
    %1759 = vmatprep.subr.bf16.mxu0 0
    %1760 = vmatpush1.bf16.msra.mxu0 %v599
    %1761 = vmatprep.subr.bf16.mxu0 0
    %1762 = vmatpush1.bf16.msra.mxu0 %v596
    %1763 = vmatprep.subr.bf16.mxu0 0
    %1764 = vmatpush1.bf16.msra.mxu0 %v593
    %1765 = vmatprep.subr.bf16.mxu0 0
    %1766 = vmatpush1.bf16.msra.mxu0 %v590
    %1767 = vmatprep.subr.bf16.mxu0 0
    %1768 = vmatpush1.bf16.msra.mxu0 %v587
    %1769 = vmatprep.subr.bf16.mxu0 0
    %1770 = vmatpush1.bf16.msra.mxu0 %v584
    %1771 = vmatprep.subr.bf16.mxu0 0
    %1772 = vmatpush2.bf16.msra.mxu0 0
    %1773 = vmatprep.subr.bf16.mxu0 0
    %1774 = vmatpush2.bf16.msra.mxu0 0
    %1775 = vmatprep.subr.bf16.mxu0 0
    %1776 = vmatpush2.bf16.msra.mxu0 0
    %1777 = vmatprep.subr.bf16.mxu0 0
    %1778 = vmatpush2.bf16.msra.mxu0 0
    %1779 = vmatprep.subr.bf16.mxu0 0
    %1780 = vmatpush2.bf16.msra.mxu0 0
    %1781 = vmatprep.subr.bf16.mxu0 0
    %1782 = vmatpush2.bf16.msra.mxu0 0
    %1783 = vmatprep.subr.bf16.mxu0 0
    %1784 = vmatpush2.bf16.msra.mxu0 0
    %1785 = vmatprep.subr.bf16.mxu0 0
    %1786 = vmatpush2.bf16.msra.mxu0 0
    %1787 = vmatprep.mubr.bf16.mxu0 0
    %1788 = vmatmul.mubr.bf16.gmra.mxu0 %v1711
    %v1789 = vpop.f32.mrf.mxu0
    %v1790 = vadd.f32 %v498, %v1789
    %v1791 = vpop.f32.mrf.mxu0
    %v1792 = vpop.f32.mrf.mxu0
    %v1793 = vadd.f32 %v498, %v1792
    %v1794 = vpop.f32.mrf.mxu0
    %1795 = vdwg.mxu0
    %v1796 = vadd.f32 %v1705, %v1747
    %v1797 = vadd.f32 %v1708, %v1751
    %v1798 = vxor.u32 %v1796, 2147483648
    %v1799 = vxor.u32 %v1797, 2147483648
    %v1800 = vmul.f32 %v1798, 1.442695
    %v1801 = vpow.pop %v1800
    %v1802 = vmul.f32 %v1799, 1.442695
    %v1803 = vpow.pop %v1802
    %v1804 = vadd.f32 %v1801, 1.0
    %v1805 = vadd.f32 %v1803, 1.0
    %v1806 = vrcp.pop %v1804
    %v1807 = vmul.f32 1.0, %v1806
    %v1808 = vrcp.pop %v1805
    %v1809 = vmul.f32 1.0, %v1808
    %v1810 = vadd.f32 %v1706, %v1749
    %v1811 = vadd.f32 %v1709, %v1753
    %v1812 = vxor.u32 %v1810, 2147483648
    %v1813 = vxor.u32 %v1811, 2147483648
    %v1814 = vmul.f32 %v1812, 1.442695
    %v1815 = vpow.pop %v1814
    %v1816 = vmul.f32 %v1813, 1.442695
    %v1817 = vpow.pop %v1816
    %v1818 = vadd.f32 %v1815, 1.0
    %v1819 = vadd.f32 %v1817, 1.0
    %v1820 = vrcp.pop %v1818
    %v1821 = vmul.f32 1.0, %v1820
    %v1822 = vrcp.pop %v1819
    %v1823 = vmul.f32 1.0, %v1822
    %v1824 = vmul.f32 %v1807, %v1790
    %v1825 = vmul.f32 %v1809, %v1793
    %v1826 = vadd.f32 %v1707, %v1824
    %v1827 = vadd.f32 %v1710, %v1825
    %v1828 = vtanh.pop %v1826
    %v1829 = vtanh.pop %v1827
    %v1830 = vsub.f32 1.0, %v1821
    %v1831 = vsub.f32 1.0, %v1823
    %v1832 = vmul.f32 %v1830, %v1828
    %v1833 = vmul.f32 %v1831, %v1829
    %v1834 = vmul.f32 %v1821, %v1700
    %v1835 = vmul.f32 %v1823, %v1701
    %v1836 = vadd.f32 %v1832, %v1834
    %v1837 = vadd.f32 %v1833, %v1835
    %s1838 = scalar_lea.vmem %s1, 112
    %v1839 = vld [vmem:[%s1838] sm:$0xff]
    %v1840 = vld [vmem:[%s1838 + $0x8] sm:$0xff]
    %v1841 = vsub.f32 %v1836, %v1700
    %v1842 = vsub.f32 %v1837, %v1701
    %1844 = vset.pattern.permute.xlu0 0
    %1845 = vperm.xlu0 %1844, %v1839
    %v1846 = vpop.permute.xlu0 %1845
    %1849 = vset.pattern.permute.xlu0 0
    %1850 = vperm.xlu0 %1849, %v1840
    %v1851 = vpop.permute.xlu0 %1850
    %v1853 = vmul.f32 %v1846, %v1841
    %v1854 = vmul.f32 %v1851, %v1842
    %v1855 = vadd.f32 %v1700, %v1853
    %v1856 = vadd.f32 %v1701, %v1854
    %v1857 = vlaneseq
    %v1858 = vand.u32 %v1857, 127
    %vm1859 = vcmp.ge.s32.totalorder %v1858, 0
    %vm1860 = vcmp.lt.s32.totalorder %v1858, 32
    %vm1861 = vmand %vm1859, %vm1860
    %v1862 = vsel %vm1861, 1, 0
    %v1863 = vcvt.s32.f32 %v1862
    %v1864 = vmul.f32 %v1855, %v1863
    %v1865 = vmul.f32 %v1856, %v1863
    %vm1866 = vcmp.ge.s32.totalorder %v1858, 32
    %vm1867 = vcmp.lt.s32.totalorder %v1858, 64
    %vm1868 = vmand %vm1866, %vm1867
    %v1869 = vsel %vm1868, 1, 0
    %v1870 = vcvt.s32.f32 %v1869
    %v1871 = vmul.f32 %v1855, %v1870
    %v1872 = vmul.f32 %v1856, %v1870
    %vm1873 = vcmp.ge.s32.totalorder %v1858, 64
    %vm1874 = vcmp.lt.s32.totalorder %v1858, 96
    %vm1875 = vmand %vm1873, %vm1874
    %v1876 = vsel %vm1875, 1, 0
    %v1877 = vcvt.s32.f32 %v1876
    %v1878 = vmul.f32 %v1855, %v1877
    %v1879 = vmul.f32 %v1856, %v1877
    %vm1880 = vcmp.ge.s32.totalorder %v1858, 96
    %vm1881 = vcmp.lt.s32.totalorder %v1858, 128
    %vm1882 = vmand %vm1880, %vm1881
    %v1883 = vsel %vm1882, 1, 0
    %v1884 = vcvt.s32.f32 %v1883
    %v1885 = vmul.f32 %v1855, %v1884
    %v1886 = vmul.f32 %v1856, %v1884
    %v1887 = vld [vmem:[%s6] sm:$0xff]
    %vm1888 = vcmask 523264
    %v1890 = vsel %vm1888, %v1887, 0
    %1892 = vmatprep.subr.mxu0 0.0
    %1893 = vmatpush1.msra.mxu0 0.0
    %1894 = vmatprep.subr.mxu0 0.0
    %1895 = vmatpush1.msra.mxu0 0.0
    %1896 = vmatprep.subr.mxu0 0.0
    %1897 = vmatpush1.msra.mxu0 0.0
    %1898 = vmatprep.subr.mxu0 0.0
    %1899 = vmatpush1.msra.mxu0 0.0
    %1900 = vmatprep.subr.mxu0 0.0
    %1901 = vmatpush1.msra.mxu0 0.0
    %1902 = vmatprep.subr.mxu0 0.0
    %1903 = vmatpush1.msra.mxu0 0.0
    %1904 = vmatprep.subr.mxu0 0.0
    %1905 = vmatpush1.msra.mxu0 0.0
    %1906 = vmatprep.subr.mxu0 0.0
    %1907 = vmatpush1.msra.mxu0 0.0
    %1908 = vmatprep.subr.mxu0 0.0
    %1909 = vmatpush1.msra.mxu0 %v1886
    %1910 = vmatprep.subr.mxu0 0.0
    %1911 = vmatpush1.msra.mxu0 %v1885
    %1912 = vmatprep.subr.mxu0 0.0
    %1913 = vmatpush1.msra.mxu0 %v1879
    %1914 = vmatprep.subr.mxu0 0.0
    %1915 = vmatpush1.msra.mxu0 %v1878
    %1916 = vmatprep.subr.mxu0 0.0
    %1917 = vmatpush1.msra.mxu0 %v1872
    %1918 = vmatprep.subr.mxu0 0.0
    %1919 = vmatpush1.msra.mxu0 %v1871
    %1920 = vmatprep.subr.mxu0 0.0
    %1921 = vmatpush1.msra.mxu0 %v1865
    %1922 = vmatprep.subr.mxu0 0.0
    %1923 = vmatpush1.msra.mxu0 %v1864
    %1924 = vmatprep.subr.mxu0 0.0
    %1925 = vmatpush2.msra.mxu0 0.0
    %1926 = vmatprep.subr.mxu0 0.0
    %1927 = vmatpush2.msra.mxu0 0.0
    %1928 = vmatprep.subr.mxu0 0.0
    %1929 = vmatpush2.msra.mxu0 0.0
    %1930 = vmatprep.subr.mxu0 0.0
    %1931 = vmatpush2.msra.mxu0 0.0
    %1932 = vmatprep.subr.mxu0 0.0
    %1933 = vmatpush2.msra.mxu0 0.0
    %1934 = vmatprep.subr.mxu0 0.0
    %1935 = vmatpush2.msra.mxu0 0.0
    %1936 = vmatprep.subr.mxu0 0.0
    %1937 = vmatpush2.msra.mxu0 0.0
    %1938 = vmatprep.subr.mxu0 0.0
    %1939 = vmatpush2.msra.mxu0 0.0
    %1940 = vmatprep.subr.mxu0 0.0
    %1941 = vmatpush2.msra.mxu0 0.0
    %1942 = vmatprep.subr.mxu0 0.0
    %1943 = vmatpush2.msra.mxu0 0.0
    %1944 = vmatprep.subr.mxu0 0.0
    %1945 = vmatpush2.msra.mxu0 0.0
    %1946 = vmatprep.subr.mxu0 0.0
    %1947 = vmatpush2.msra.mxu0 0.0
    %1948 = vmatprep.subr.mxu0 0.0
    %1949 = vmatpush2.msra.mxu0 0.0
    %1950 = vmatprep.subr.mxu0 0.0
    %1951 = vmatpush2.msra.mxu0 0.0
    %1952 = vmatprep.subr.mxu0 0.0
    %1953 = vmatpush2.msra.mxu0 0.0
    %1954 = vmatprep.subr.mxu0 0.0
    %1955 = vmatpush2.msra.mxu0 0.0
    %1956 = vmatprep.mubr.f32.mxu0 0.0
    %1957 = vmatmul.mubr.f32.gmra.mxu0 %v1890
    %v1958 = vpop.f32.mrf.mxu0
    %v1959 = vadd.f32 0.0, %v1958
    %v1960 = vpop.f32.mrf.mxu0
    %1961 = vdwg.mxu0
    %v1962 = vpack.c.bf16 %v1959, %v1959
    %v1963 = vld [vmem:[%s7] sm:$0xf]
    %v1964 = vld [vmem:[%s7 + $0x4] sm:$0xf]
    %v1965 = vld [vmem:[%s7 + $0x8] sm:$0xf]
    %v1966 = vld [vmem:[%s7 + $0xc] sm:$0xf]
    %v1967 = vld [vmem:[%s7 + $0x10] sm:$0xf]
    %v1968 = vld [vmem:[%s7 + $0x14] sm:$0xf]
    %v1969 = vld [vmem:[%s7 + $0x18] sm:$0xf]
    %v1970 = vld [vmem:[%s7 + $0x1c] sm:$0xf]
    %v1971 = vld [vmem:[%s7 + $0x20] sm:$0xf]
    %v1972 = vld [vmem:[%s7 + $0x24] sm:$0xf]
    %v1973 = vld [vmem:[%s7 + $0x28] sm:$0xf]
    %v1974 = vld [vmem:[%s7 + $0x2c] sm:$0xf]
    %v1975 = vld [vmem:[%s7 + $0x30] sm:$0xf]
    %v1976 = vld [vmem:[%s7 + $0x34] sm:$0xf]
    %v1977 = vld [vmem:[%s7 + $0x38] sm:$0xf]
    %v1978 = vld [vmem:[%s7 + $0x3c] sm:$0xf]
    %v1979 = vld [vmem:[%s8] sm:$0x1]
    %v1981 = vlaneseq
    %v1982 = vshrl.u32 %v1981, 7
    %v1983 = vsub.s32 0, %v1982
    %v1984 = vrot.slane %v1979, %v1983
    %v2002 = vunpack.c.l.b16 %v1963
    %v2003 = vunpack.c.l.b16 %v1964
    %v2004 = vunpack.c.l.b16 %v1965
    %v2005 = vunpack.c.l.b16 %v1966
    %v2006 = vunpack.c.l.b16 %v1967
    %v2007 = vunpack.c.l.b16 %v1968
    %v2008 = vunpack.c.l.b16 %v1969
    %v2009 = vunpack.c.l.b16 %v1970
    %v2010 = vunpack.c.l.b16 %v1971
    %v2011 = vunpack.c.l.b16 %v1972
    %v2012 = vunpack.c.l.b16 %v1973
    %v2013 = vunpack.c.l.b16 %v1974
    %v2014 = vunpack.c.l.b16 %v1975
    %v2015 = vunpack.c.l.b16 %v1976
    %v2016 = vunpack.c.l.b16 %v1977
    %v2017 = vunpack.c.l.b16 %v1978
    %v2018 = vpack.c.b16 %v2003, %v2002
    %v2019 = vpack.c.b16 %v2005, %v2004
    %v2020 = vpack.c.b16 %v2007, %v2006
    %v2021 = vpack.c.b16 %v2009, %v2008
    %v2022 = vpack.c.b16 %v2011, %v2010
    %v2023 = vpack.c.b16 %v2013, %v2012
    %v2024 = vpack.c.b16 %v2015, %v2014
    %v2025 = vpack.c.b16 %v2017, %v2016
    %2034 = vmatprep.subr.bf16.mxu0 0
    %2035 = vmatpush1.bf16.msra.mxu0 %v2025
    %2036 = vmatprep.subr.bf16.mxu0 0
    %2037 = vmatpush1.bf16.msra.mxu0 %v2024
    %2038 = vmatprep.subr.bf16.mxu0 0
    %2039 = vmatpush1.bf16.msra.mxu0 %v2023
    %2040 = vmatprep.subr.bf16.mxu0 0
    %2041 = vmatpush1.bf16.msra.mxu0 %v2022
    %2042 = vmatprep.subr.bf16.mxu0 0
    %2043 = vmatpush1.bf16.msra.mxu0 %v2021
    %2044 = vmatprep.subr.bf16.mxu0 0
    %2045 = vmatpush1.bf16.msra.mxu0 %v2020
    %2046 = vmatprep.subr.bf16.mxu0 0
    %2047 = vmatpush1.bf16.msra.mxu0 %v2019
    %2048 = vmatprep.subr.bf16.mxu0 0
    %2049 = vmatpush1.bf16.msra.mxu0 %v2018
    %2050 = vmatprep.subr.bf16.mxu0 0
    %2051 = vmatpush2.bf16.msra.mxu0 0
    %2052 = vmatprep.subr.bf16.mxu0 0
    %2053 = vmatpush2.bf16.msra.mxu0 0
    %2054 = vmatprep.subr.bf16.mxu0 0
    %2055 = vmatpush2.bf16.msra.mxu0 0
    %2056 = vmatprep.subr.bf16.mxu0 0
    %2057 = vmatpush2.bf16.msra.mxu0 0
    %2058 = vmatprep.subr.bf16.mxu0 0
    %2059 = vmatpush2.bf16.msra.mxu0 0
    %2060 = vmatprep.subr.bf16.mxu0 0
    %2061 = vmatpush2.bf16.msra.mxu0 0
    %2062 = vmatprep.subr.bf16.mxu0 0
    %2063 = vmatpush2.bf16.msra.mxu0 0
    %2064 = vmatprep.subr.bf16.mxu0 0
    %2065 = vmatpush2.bf16.msra.mxu0 0
    %2066 = vmatprep.mubr.bf16.mxu0 0
    %2067 = vmatmul.mubr.bf16.gmra.mxu0 %v1962
    %v2068 = vpop.f32.mrf.mxu0
    %v2069 = vadd.f32 %v1984, %v2068
    %v2070 = vpop.f32.mrf.mxu0
    %v2071 = vpop.f32.mrf.mxu0
    %v2072 = vpop.f32.mrf.mxu0
    %2073 = vdwg.mxu0
    %v2074 = vmax.f32 %v2069, 0.0
    %v2075 = vpack.c.bf16 %v2074, %v2074
    %v2076 = vld [vmem:[%s9] sm:$0xf]
    %v2077 = vld [vmem:[%s9 + $0x4] sm:$0xf]
    %v2078 = vld [vmem:[%s9 + $0x8] sm:$0xf]
    %v2079 = vld [vmem:[%s9 + $0xc] sm:$0xf]
    %v2080 = vld [vmem:[%s10] sm:$0x1]
    %v2082 = vlaneseq
    %v2083 = vshrl.u32 %v2082, 7
    %v2084 = vsub.s32 0, %v2083
    %v2085 = vrot.slane %v2080, %v2084
    %v2091 = vunpack.c.l.b16 %v2076
    %v2092 = vunpack.c.l.b16 %v2077
    %v2093 = vunpack.c.l.b16 %v2078
    %v2094 = vunpack.c.l.b16 %v2079
    %v2095 = vpack.c.b16 %v2092, %v2091
    %v2096 = vpack.c.b16 %v2094, %v2093
    %v2100 = vsel %vm161, %v2075, 0
    %2102 = vmatprep.subr.bf16.mxu0 0
    %2103 = vmatpush1.bf16.msra.mxu0 0
    %2104 = vmatprep.subr.bf16.mxu0 0
    %2105 = vmatpush1.bf16.msra.mxu0 0
    %2106 = vmatprep.subr.bf16.mxu0 0
    %2107 = vmatpush1.bf16.msra.mxu0 0
    %2108 = vmatprep.subr.bf16.mxu0 0
    %2109 = vmatpush1.bf16.msra.mxu0 0
    %2110 = vmatprep.subr.bf16.mxu0 0
    %2111 = vmatpush1.bf16.msra.mxu0 0
    %2112 = vmatprep.subr.bf16.mxu0 0
    %2113 = vmatpush1.bf16.msra.mxu0 0
    %2114 = vmatprep.subr.bf16.mxu0 0
    %2115 = vmatpush1.bf16.msra.mxu0 %v2096
    %2116 = vmatprep.subr.bf16.mxu0 0
    %2117 = vmatpush1.bf16.msra.mxu0 %v2095
    %2118 = vmatprep.subr.bf16.mxu0 0
    %2119 = vmatpush2.bf16.msra.mxu0 0
    %2120 = vmatprep.subr.bf16.mxu0 0
    %2121 = vmatpush2.bf16.msra.mxu0 0
    %2122 = vmatprep.subr.bf16.mxu0 0
    %2123 = vmatpush2.bf16.msra.mxu0 0
    %2124 = vmatprep.subr.bf16.mxu0 0
    %2125 = vmatpush2.bf16.msra.mxu0 0
    %2126 = vmatprep.subr.bf16.mxu0 0
    %2127 = vmatpush2.bf16.msra.mxu0 0
    %2128 = vmatprep.subr.bf16.mxu0 0
    %2129 = vmatpush2.bf16.msra.mxu0 0
    %2130 = vmatprep.subr.bf16.mxu0 0
    %2131 = vmatpush2.bf16.msra.mxu0 0
    %2132 = vmatprep.subr.bf16.mxu0 0
    %2133 = vmatpush2.bf16.msra.mxu0 0
    %2134 = vmatprep.mubr.bf16.mxu0 0
    %2135 = vmatmul.mubr.bf16.gmra.mxu0 %v2100
    %v2136 = vpop.f32.mrf.mxu0
    %v2137 = vadd.f32 %v2085, %v2136
    %v2138 = vpop.f32.mrf.mxu0
    %v2139 = vpop.f32.mrf.mxu0
    %v2140 = vpop.f32.mrf.mxu0
    %2141 = vdwg.mxu0
    %v2142 = vmax.f32 %v2137, 0.0
    %v2143 = vld [vmem:[%s11] sm:$0x1]
    %v2145 = vlaneseq
    %v2146 = vshrl.u32 %v2145, 7
    %v2147 = vsub.s32 0, %v2146
    %v2148 = vrot.slane %v2143, %v2147
    %v2150 = vmul.f32 %v2142, %v2148
    %v2151 = vsel %vm161, %v2150, 0.0
    %2152 = vadd.xlane.f32.xlu0 %v2151
    %v2153 = vpop.xlane.xlu0 %2152
    %v2154 = vld [vmem:[#allocation3] sm:$0x1]
    %v2156 = vlaneseq
    %v2157 = vshrl.u32 %v2156, 7
    %v2158 = vsub.s32 0, %v2157
    %v2159 = vrot.slane %v2154, %v2158
    %v2161 = vadd.f32 %v2153, %v2159
    %2163 = vset.pattern.permute.xlu0 0
    %2164 = vperm.xlu0 %2163, %v2161
    %v2165 = vpop.permute.xlu0 %2164
    %2167 = vst [vmem:[#allocation4] sm:$0xff] %v2165
    // Predicated region
    $region54: #{tpu_custom_call.1} parent=1 // pred_check
      _
    $region55: #{tpu_custom_call.1} parent=1 // pred_check_branch
      %2169 = sbr.rel (0) target = $region57
    $region56: #{tpu_custom_call.1} parent=1 // pred_region
      %s2171 = ssub.s32 128, 128
      %2172 = vsyncadd [#allocation5], %s2171
      %s2174 = sshll.u32 [#allocation4], 4
      %s2175 = int_to_ptr.vmem [resolvable:$true] %s2174
      %2177 = dma.vmem_to_hbm [thread:$0]  %s2175, 128, %s13, [#allocation5]
    $region57: #{tpu_custom_call.1} parent=1 // pred_fallthru
      _
    // Predicated region
    $region58: #{tpu_custom_call.1} parent=1 // pred_check
      _
    $region59: #{tpu_custom_call.1} parent=1 // pred_check_branch
      %2179 = sbr.rel (0) target = $region61
    $region60: #{tpu_custom_call.1} parent=1 // pred_region
      %2180 = dma.done [#allocation5], 128
    $region61: #{tpu_custom_call.1} parent=1 // pred_fallthru
      _
    %2181 = vsyncpa [#allocation5], 1

</llo_original>
